<compile_context>
chip_gen: v7x
topology: tpu7x:2x2x1
jax: 0.10.0
libtpu: 0.0.40
codegen_flags: <defaults>
</compile_context>

<pallas_src>
import functools

import jax
import jax.numpy as jnp
from jax.experimental import pallas as pl
from jax.experimental.pallas import tpu as pltpu

NEG_FILL = -1e9  # matches torch masked_fill value -1000000000.0


def _round_up(x, m):
    return (x + m - 1) // m * m


def _device_kind():
    try:
        return jax.devices()[0].device_kind.lower()
    except Exception:
        return ""


def _vmem_capacity_bytes():
    try:
        return int(pltpu.get_tpu_info().vmem_capacity_bytes)
    except Exception:
        kind = _device_kind()
        if "v7" in kind:
            return 64 << 20
        if "v2" in kind or "v3" in kind:
            return 16 << 20
        return 128 << 20


def _default_tile_p():
    kind = _device_kind()
    if "v7" in kind:
        return 2048          # 64 MiB VMEM per TensorCore
    if "v2" in kind or "v3" in kind:
        return 512           # tiny VMEM parts
    return 4096              # v4 / v5 / v6: 128 MiB VMEM


def _default_fuse_w2():
    # Fused W2 (one (V*H, V*D+V) matmul) only pays off on 256-wide MXUs
    # (v6e / v7x).  On 128-wide MXU chips (<= v5) the ~136-wide N spills into
    # a second N-tile and costs MORE pushes than the split factorization.
    kind = _device_kind()
    return not any(t in kind for t in ("v2", "v3", "v4", "v5"))


def _vmem_limit_bytes(tile_p, V, C, H, D, fused):
    """Scoped-VMEM limit derived from actual buffer sizes, capped to capacity."""
    n2 = (V * D + V) if fused else H
    # double-buffered pipeline blocks (inputs + output + resident weights)
    io = tile_p * (V * C * 4 + V * 1 + D * 4)
    w = V * C * V * H * 2 + V * H * 4
    if fused:
        w += V * H * (V * D + V) * 2 + (V * D + V) * 4
    else:
        w += V * H * V * 2 + V * 4 + H * D * 2 + D * 4
    est = 2 * (io + w)
    # in-kernel intermediates: f32 matmul accumulator, bf16 h, bf16 x cast,
    # lane-padded f32 second-stage outputs (x2 slack for compiler temps).
    est += tile_p * V * H * (4 + 2)
    est += tile_p * V * C * 2
    est += tile_p * _round_up(n2, 128) * 4 * 2
    cap = _vmem_capacity_bytes()
    floor = min(48 << 20, cap // 2)
    return int(min(max(est, floor), cap - (8 << 20)))


# --------------------------------------------------------------------------
# Kernels
# --------------------------------------------------------------------------
def _mvh_fused_kernel(x_ref, inv_ref, w1_ref, b1_ref, w2_ref, b2_ref, out_ref,
                      *, V, D):
    """Fused-W2 path (256-wide MXU chips: v6e / v7x).

    x_ref:   (tile_p, V*C)   f32   view-packed input rows
    inv_ref: (tile_p, V)     int8  1 = invalid view
    w1_ref:  (V*C, V*H)      bf16  block-diagonal first Linear
    b1_ref:  (1, V*H)        f32
    w2_ref:  (V*H, V*D+V)    bf16  block-diag second Linear [features | logits]
    b2_ref:  (1, V*D+V)      f32
    out_ref: (tile_p, D)     f32
    """
    VD = V * D
    x = x_ref[...].astype(jnp.bfloat16)                        # cast at MXU boundary
    h = jnp.dot(x, w1_ref[...], preferred_element_type=jnp.float32)
    # bias + ReLU in f32, then materialize h exactly once, directly as bf16.
    h = jnp.maximum(h + b1_ref[...], 0.0).astype(jnp.bfloat16)
    # single fused second Linear: per-view features and per-view logits.
    o2 = jnp.dot(h, w2_ref[...], preferred_element_type=jnp.float32) + b2_ref[...]
    feats = o2[:, :VD]                                          # (tile_p, V*D)
    logits = o2[:, VD:]                                         # (tile_p, V)
    # masked softmax over the view axis (all-invalid rows degrade to a uniform
    # average, matching torch masked_fill semantics).
    logits = jnp.where(inv_ref[...] != 0, NEG_FILL, logits)
    m = jnp.max(logits, axis=-1, keepdims=True)
    e = jnp.exp(logits - m)
    wts = e / jnp.sum(e, axis=-1, keepdims=True)                # (tile_p, V) f32
    # weighted view reduction as lane-slice FMAs on the V*D feature slab.
    acc = wts[:, 0:1] * feats[:, 0:D]
    for v in range(1, V):
        acc = acc + wts[:, v:v + 1] * feats[:, v * D:(v + 1) * D]
    out_ref[...] = acc


def _mvh_split_kernel(x_ref, inv_ref, w1_ref, b1_ref, w2l_ref, b2l_ref,
                      w2f_ref, b2f_ref, out_ref, *, V, H):
    """Split / commute-with-affine path (128-wide MXU chips: <= v5).

    Softmax weights sum to 1, so the weighted view average commutes with the
    affine second Linear: average h over views in f32 on the VPU, then apply
    the (H, D) feature columns of W2 once.
    """
    x = x_ref[...].astype(jnp.bfloat16)
    h = jnp.dot(x, w1_ref[...], preferred_element_type=jnp.float32)
    h = jnp.maximum(h + b1_ref[...], 0.0).astype(jnp.bfloat16)  # (tile_p, V*H) bf16
    logits = (jnp.dot(h, w2l_ref[...], preferred_element_type=jnp.float32)
              + b2l_ref[...])                                   # (tile_p, V)
    logits = jnp.where(inv_ref[...] != 0, NEG_FILL, logits)
    m = jnp.max(logits, axis=-1, keepdims=True)
    e = jnp.exp(logits - m)
    wts = e / jnp.sum(e, axis=-1, keepdims=True)
    # f32 accumulation (bf16 h promotes per-op; no second f32 copy of h).
    hbar = wts[:, 0:1] * h[:, 0:H]
    for v in range(1, V):
        hbar = hbar + wts[:, v:v + 1] * h[:, v * H:(v + 1) * H]
    out_ref[...] = (jnp.dot(hbar.astype(jnp.bfloat16), w2f_ref[...],
                            preferred_element_type=jnp.float32) + b2f_ref[...])


# --------------------------------------------------------------------------
# Weight packing (block-diagonal per-view MLP)
# --------------------------------------------------------------------------
def _pack_common(w1, b1, V):
    C, H = w1.shape
    eye = jnp.eye(V, dtype=jnp.float32)
    # w1bd[v*C + i, u*H + j] = w1[i, j] if v == u else 0
    w1bd = (eye[:, None, :, None] * w1[None, :, None, :]).reshape(V * C, V * H)
    b1bd = jnp.tile(b1.reshape(1, H), (1, V)).astype(jnp.float32)
    return w1bd.astype(jnp.bfloat16), b1bd


def _pack_params_fused(w1, b1, w2, b2, V):
    C, H = w1.shape
    Dp1 = w2.shape[1]
    D = Dp1 - 1
    w1bd, b1bd = _pack_common(w1, b1, V)
    eye = jnp.eye(V, dtype=jnp.float32)
    # feature columns: [v*H + k, u*D + d] = w2[k, 1+d] if v == u else 0
    w2feat = (eye[:, None, :, None] * w2[None, :, None, 1:]).reshape(V * H, V * D)
    # logit columns:   [v*H + k, u]       = w2[k, 0]    if v == u else 0
    w2log = (eye[:, None, :] * w2[None, :, 0:1]).reshape(V * H, V)
    w2bd = jnp.concatenate([w2feat, w2log], axis=1).astype(jnp.bfloat16)
    b2r = b2.reshape(1, Dp1).astype(jnp.float32)
    b2bd = jnp.concatenate([jnp.tile(b2r[:, 1:], (1, V)),
                            jnp.broadcast_to(b2r[:, 0:1], (1, V))], axis=1)
    return w1bd, b1bd, w2bd, b2bd


def _pack_params_split(w1, b1, w2, b2, V):
    C, H = w1.shape
    Dp1 = w2.shape[1]
    w1bd, b1bd = _pack_common(w1, b1, V)
    eye = jnp.eye(V, dtype=jnp.float32)
    w2lbd = (eye[:, None, :] * w2[None, :, 0:1]).reshape(V * H, V).astype(jnp.bfloat16)
    b2r = b2.reshape(1, Dp1).astype(jnp.float32)
    b2l = jnp.broadcast_to(b2r[:, 0:1], (1, V))
    w2f = w2[:, 1:].astype(jnp.bfloat16)
    b2f = b2r[:, 1:]
    return w1bd, b1bd, w2lbd, b2l, w2f, b2f


# --------------------------------------------------------------------------
# Wrapper
# --------------------------------------------------------------------------
@functools.partial(jax.jit, static_argnames=("tile_p", "fuse_w2"))
def simple_multi_view_head(sampled_features, invalid_features, params,
                           tile_p=None, fuse_w2=None):
    """Forward pass of SimpleMultiViewHead (do_=0.0, eval semantics).

    sampled_features: [B, M, V, C] float32
    invalid_features: [B, M, V] bool
    params: (w1 [C, H], b1 [1, H] or [H], w2 [H, D+1], b2 [1, D+1] or [D+1])
    returns density_field: [B, M, D] float32
    """
    w1, b1, w2, b2 = params
    B, M, V, C = sampled_features.shape
    H = w1.shape[1]
    Dp1 = w2.shape[1]
    D = Dp1 - 1
    P = B * M

    if tile_p is None:
        tile_p = _default_tile_p()
    if fuse_w2 is None:
        fuse_w2 = _default_fuse_w2()

    # Keep the grid length >= 2 so the "parallel" axis splits across both v7x
    # TensorCores even for small P.  Quantum 32 keeps every dtype's block
    # (incl. the int8 mask) legally tiled when the block != full array dim.
    tile_p = max(32, min(tile_p, _round_up(pl.cdiv(P, 2), 32)))
    grid = (int(pl.cdiv(P, tile_p)),)

    # Pack all V views of a point into one matmul row.  Row-major reshape is
    # free (no HBM copy) and the features stay f32 — the kernel casts to bf16
    # right before the MXU.  Mask travels as int8.
    x = sampled_features.reshape(P, V * C)
    inv = invalid_features.reshape(P, V).astype(jnp.int8)

    vmem_limit = _vmem_limit_bytes(tile_p, V, C, H, D, fuse_w2)
    cparams = pltpu.CompilerParams(dimension_semantics=("parallel",),
                                   vmem_limit_bytes=vmem_limit)

    def point_spec(last):
        return pl.BlockSpec((tile_p, last), lambda i: (i, 0))

    def const_spec(r, c):
        return pl.BlockSpec((r, c), lambda i: (0, 0))

    if fuse_w2:
        w1bd, b1bd, w2bd, b2bd = _pack_params_fused(w1, b1, w2, b2, V)
        NW = V * D + V
        kernel = functools.partial(_mvh_fused_kernel, V=V, D=D)
        in_specs = [point_spec(V * C), point_spec(V),
                    const_spec(V * C, V * H), const_spec(1, V * H),
                    const_spec(V * H, NW), const_spec(1, NW)]
        args = (x, inv, w1bd, b1bd, w2bd, b2bd)
    else:
        w1bd, b1bd, w2lbd, b2l, w2f, b2f = _pack_params_split(w1, b1, w2, b2, V)
        kernel = functools.partial(_mvh_split_kernel, V=V, H=H)
        in_specs = [point_spec(V * C), point_spec(V),
                    const_spec(V * C, V * H), const_spec(1, V * H),
                    const_spec(V * H, V), const_spec(1, V),
                    const_spec(H, D), const_spec(1, D)]
        args = (x, inv, w1bd, b1bd, w2lbd, b2l, w2f, b2f)

    out = pl.pallas_call(
        kernel,
        out_shape=jax.ShapeDtypeStruct((P, D), jnp.float32),
        grid_spec=pltpu.PrefetchScalarGridSpec(
            num_scalar_prefetch=0,
            grid=grid,
            in_specs=in_specs,
            out_specs=point_spec(D)),
        compiler_params=cparams,
    )(*args)

    return out.reshape(B, M, D)


# --------------------------------------------------------------------------
# Self-test
# --------------------------------------------------------------------------
if __name__ == "__main__":
    # Small shapes consistent with the module's forward.  M chosen so P=96
    # exercises a multi-step grid AND a ragged (partial) last block.
    B, M, V, C = 2, 48, 8, 32          # batch, sample points, views, d_in
    H, D = 64, 16                      # mlp hidden, d_out (mlp outputs D+1)

    key = jax.random.PRNGKey(0)
    k1, k2, k3, k4, k5, k6 = jax.random.split(key, 6)

    sampled_features = jax.random.normal(k1, (B, M, V, C), dtype=jnp.float32)
    invalid_features = jax.random.bernoulli(k2, 0.3, (B, M, V))
    invalid_features = invalid_features.at[..., 0].set(False)  # >=1 valid view

    w1 = 0.1 * jax.random.normal(k3, (C, H), dtype=jnp.float32)
    b1 = 0.1 * jax.random.normal(k4, (1, H), dtype=jnp.float32)
    w2 = 0.1 * jax.random.normal(k5, (H, D + 1), dtype=jnp.float32)
    b2 = 0.1 * jax.random.normal(k6, (1, D + 1), dtype=jnp.float32)
    params = (w1, b1, w2, b2)

    # Run both code paths regardless of the chip (the choice is perf-only).
    out_fused = simple_multi_view_head(sampled_features, invalid_features,
                                       params, fuse_w2=True)
    out_split = simple_multi_view_head(sampled_features, invalid_features,
                                       params, fuse_w2=False)
    out_fused = jax.block_until_ready(out_fused)
    out_split = jax.block_until_ready(out_split)

    # --- references ---------------------------------------------------------
    def bf(a):
        return a.astype(jnp.bfloat16).astype(jnp.float32)

    x2d = sampled_features.reshape(-1, C)                       # (P*V, C)
    h_bf = bf(jnp.maximum(bf(x2d) @ bf(w1) + b1, 0.0))          # kernel's bf16 h
    o_pv = (h_bf @ bf(w2) + b2).reshape(B, M, V, D + 1)
    logits = jnp.where(invalid_features, NEG_FILL, o_pv[..., 0])
    wts = jax.nn.softmax(logits, axis=-1)
    ref_fused = jnp.sum(o_pv[..., 1:] * wts[..., None], axis=-2)

    hbar = jnp.sum(wts[..., None] * h_bf.reshape(B, M, V, H), axis=-2)
    ref_split = bf(hbar) @ bf(w2[:, 1:]) + b2[:, 1:]

    h32 = jnp.maximum(x2d @ w1 + b1, 0.0)
    o32 = (h32 @ w2 + b2).reshape(B, M, V, D + 1)
    wts32 = jax.nn.softmax(jnp.where(invalid_features, NEG_FILL, o32[..., 0]), -1)
    ref_f32 = jnp.sum(o32[..., 1:] * wts32[..., None], axis=-2)

    for name, out, ref in (("fused", out_fused, ref_fused),
                           ("split", out_split, ref_split)):
        assert out.shape == (B, M, D)
        err = float(jnp.max(jnp.abs(out - ref)))
        assert jnp.allclose(out, ref, atol=1e-2, rtol=1e-2), (name, err)
        err32 = float(jnp.max(jnp.abs(out - ref_f32)))
        assert jnp.allclose(out, ref_f32, atol=5e-2, rtol=5e-2), (name, err32)

    print("KERNEL_OK")
</pallas_src>

<mosaic_0001>
module attributes {stable_mosaic.version = 11 : i64} {
  func.func @_mvh_fused_kernel(%arg0: i32, %arg1: memref<64x256xf32, #tpu.memory_space<vmem>>, %arg2: memref<64x8xi8, #tpu.memory_space<vmem>>, %arg3: memref<256x512xbf16, #tpu.memory_space<vmem>>, %arg4: memref<1x512xf32, #tpu.memory_space<vmem>>, %arg5: memref<512x136xbf16, #tpu.memory_space<vmem>>, %arg6: memref<1x136xf32, #tpu.memory_space<vmem>>, %arg7: memref<64x16xf32, #tpu.memory_space<vmem>>) attributes {dimension_semantics = [#tpu.dimension_semantics<parallel>], iteration_bounds = array<i64: 2>, scalar_prefetch = 0 : i64, scratch_operands = 0 : i64, tpu.core_type = #tpu.core_type<tc>, window_params = [{transform_indices = @transform_0, window_bounds = array<i64: 64, 256>}, {transform_indices = @transform_1, window_bounds = array<i64: 64, 8>}, {pipeline_mode = #tpu.pipeline_mode<synchronous>, transform_indices = @transform_2, window_bounds = array<i64: 256, 512>}, {pipeline_mode = #tpu.pipeline_mode<synchronous>, transform_indices = @transform_3, window_bounds = array<i64: 1, 512>}, {pipeline_mode = #tpu.pipeline_mode<synchronous>, transform_indices = @transform_4, window_bounds = array<i64: 512, 136>}, {pipeline_mode = #tpu.pipeline_mode<synchronous>, transform_indices = @transform_5, window_bounds = array<i64: 1, 136>}, {transform_indices = @transform_6, window_bounds = array<i64: 64, 16>}]} {
    %c0 = arith.constant 0 : index
    %c0_0 = arith.constant 0 : index
    %0 = vector.load %arg1[%c0, %c0_0] : memref<64x256xf32, #tpu.memory_space<vmem>>, vector<64x256xf32>
    %1 = arith.truncf %0 : vector<64x256xf32> to vector<64x256xbf16>
    %c0_1 = arith.constant 0 : index
    %c0_2 = arith.constant 0 : index
    %2 = vector.load %arg3[%c0_1, %c0_2] : memref<256x512xbf16, #tpu.memory_space<vmem>>, vector<256x512xbf16>
    %cst = arith.constant dense<0.000000e+00> : vector<64x512xf32>
    %3 = tpu.matmul %1, %2, %cst {dimension_numbers = #tpu.dot_dimension_numbers<[1], [0], [0], [1], [0, 0, 1, 1], [], []>} : vector<64x256xbf16>, vector<256x512xbf16>, vector<64x512xf32> -> vector<64x512xf32>
    %c0_3 = arith.constant 0 : index
    %c0_4 = arith.constant 0 : index
    %4 = vector.load %arg4[%c0_3, %c0_4] : memref<1x512xf32, #tpu.memory_space<vmem>>, vector<1x512xf32>
    %5 = vector.broadcast %4 : vector<1x512xf32> to vector<64x512xf32>
    %6 = arith.addf %3, %5 : vector<64x512xf32>
    %cst_5 = arith.constant 0.000000e+00 : f32
    %7 = vector.broadcast %cst_5 : f32 to vector<64x512xf32>
    %8 = arith.maximumf %6, %7 : vector<64x512xf32>
    %9 = arith.truncf %8 : vector<64x512xf32> to vector<64x512xbf16>
    %c0_6 = arith.constant 0 : index
    %c0_7 = arith.constant 0 : index
    %10 = vector.load %arg5[%c0_6, %c0_7] : memref<512x136xbf16, #tpu.memory_space<vmem>>, vector<512x136xbf16>
    %cst_8 = arith.constant dense<0.000000e+00> : vector<64x136xf32>
    %11 = tpu.matmul %9, %10, %cst_8 {dimension_numbers = #tpu.dot_dimension_numbers<[1], [0], [0], [1], [0, 0, 1, 1], [], []>} : vector<64x512xbf16>, vector<512x136xbf16>, vector<64x136xf32> -> vector<64x136xf32>
    %c0_9 = arith.constant 0 : index
    %c0_10 = arith.constant 0 : index
    %12 = vector.load %arg6[%c0_9, %c0_10] : memref<1x136xf32, #tpu.memory_space<vmem>>, vector<1x136xf32>
    %13 = vector.broadcast %12 : vector<1x136xf32> to vector<64x136xf32>
    %14 = arith.addf %11, %13 : vector<64x136xf32>
    %15 = vector.extract_strided_slice %14 {offsets = [0, 0], sizes = [64, 128], strides = [1, 1]} : vector<64x136xf32> to vector<64x128xf32>
    %16 = vector.extract_strided_slice %14 {offsets = [0, 128], sizes = [64, 8], strides = [1, 1]} : vector<64x136xf32> to vector<64x8xf32>
    %c0_11 = arith.constant 0 : index
    %c0_12 = arith.constant 0 : index
    %17 = vector.load %arg2[%c0_11, %c0_12] : memref<64x8xi8, #tpu.memory_space<vmem>>, vector<64x8xi8>
    %c0_i8 = arith.constant 0 : i8
    %18 = vector.broadcast %c0_i8 : i8 to vector<64x8xi8>
    %19 = arith.cmpi ne, %17, %18 : vector<64x8xi8>
    %cst_13 = arith.constant -1.000000e+09 : f32
    %20 = vector.broadcast %cst_13 : f32 to vector<64x8xf32>
    %21 = arith.select %19, %20, %16 : vector<64x8xi1>, vector<64x8xf32>
    %cst_14 = arith.constant dense<0xFF800000> : vector<64xf32>
    %22 = vector.multi_reduction <maximumf>, %21, %cst_14 [1] : vector<64x8xf32> to vector<64xf32>
    %23 = vector.shape_cast %22 : vector<64xf32> to vector<64x1xf32>
    %24 = vector.broadcast %23 : vector<64x1xf32> to vector<64x8xf32>
    %25 = arith.subf %21, %24 : vector<64x8xf32>
    %26 = math.exp %25 : vector<64x8xf32>
    %cst_15 = arith.constant dense<0.000000e+00> : vector<64xf32>
    %27 = vector.multi_reduction <add>, %26, %cst_15 [1] : vector<64x8xf32> to vector<64xf32>
    %28 = vector.shape_cast %27 : vector<64xf32> to vector<64x1xf32>
    %29 = vector.broadcast %28 : vector<64x1xf32> to vector<64x8xf32>
    %30 = arith.divf %26, %29 : vector<64x8xf32>
    %31 = vector.extract_strided_slice %30 {offsets = [0, 0], sizes = [64, 1], strides = [1, 1]} : vector<64x8xf32> to vector<64x1xf32>
    %32 = vector.extract_strided_slice %15 {offsets = [0, 0], sizes = [64, 16], strides = [1, 1]} : vector<64x128xf32> to vector<64x16xf32>
    %33 = vector.broadcast %31 : vector<64x1xf32> to vector<64x16xf32>
    %34 = arith.mulf %33, %32 : vector<64x16xf32>
    %35 = vector.extract_strided_slice %30 {offsets = [0, 1], sizes = [64, 1], strides = [1, 1]} : vector<64x8xf32> to vector<64x1xf32>
    %36 = vector.extract_strided_slice %15 {offsets = [0, 16], sizes = [64, 16], strides = [1, 1]} : vector<64x128xf32> to vector<64x16xf32>
    %37 = vector.broadcast %35 : vector<64x1xf32> to vector<64x16xf32>
    %38 = arith.mulf %37, %36 : vector<64x16xf32>
    %39 = arith.addf %34, %38 : vector<64x16xf32>
    %40 = vector.extract_strided_slice %30 {offsets = [0, 2], sizes = [64, 1], strides = [1, 1]} : vector<64x8xf32> to vector<64x1xf32>
    %41 = vector.extract_strided_slice %15 {offsets = [0, 32], sizes = [64, 16], strides = [1, 1]} : vector<64x128xf32> to vector<64x16xf32>
    %42 = vector.broadcast %40 : vector<64x1xf32> to vector<64x16xf32>
    %43 = arith.mulf %42, %41 : vector<64x16xf32>
    %44 = arith.addf %39, %43 : vector<64x16xf32>
    %45 = vector.extract_strided_slice %30 {offsets = [0, 3], sizes = [64, 1], strides = [1, 1]} : vector<64x8xf32> to vector<64x1xf32>
    %46 = vector.extract_strided_slice %15 {offsets = [0, 48], sizes = [64, 16], strides = [1, 1]} : vector<64x128xf32> to vector<64x16xf32>
    %47 = vector.broadcast %45 : vector<64x1xf32> to vector<64x16xf32>
    %48 = arith.mulf %47, %46 : vector<64x16xf32>
    %49 = arith.addf %44, %48 : vector<64x16xf32>
    %50 = vector.extract_strided_slice %30 {offsets = [0, 4], sizes = [64, 1], strides = [1, 1]} : vector<64x8xf32> to vector<64x1xf32>
    %51 = vector.extract_strided_slice %15 {offsets = [0, 64], sizes = [64, 16], strides = [1, 1]} : vector<64x128xf32> to vector<64x16xf32>
    %52 = vector.broadcast %50 : vector<64x1xf32> to vector<64x16xf32>
    %53 = arith.mulf %52, %51 : vector<64x16xf32>
    %54 = arith.addf %49, %53 : vector<64x16xf32>
    %55 = vector.extract_strided_slice %30 {offsets = [0, 5], sizes = [64, 1], strides = [1, 1]} : vector<64x8xf32> to vector<64x1xf32>
    %56 = vector.extract_strided_slice %15 {offsets = [0, 80], sizes = [64, 16], strides = [1, 1]} : vector<64x128xf32> to vector<64x16xf32>
    %57 = vector.broadcast %55 : vector<64x1xf32> to vector<64x16xf32>
    %58 = arith.mulf %57, %56 : vector<64x16xf32>
    %59 = arith.addf %54, %58 : vector<64x16xf32>
    %60 = vector.extract_strided_slice %30 {offsets = [0, 6], sizes = [64, 1], strides = [1, 1]} : vector<64x8xf32> to vector<64x1xf32>
    %61 = vector.extract_strided_slice %15 {offsets = [0, 96], sizes = [64, 16], strides = [1, 1]} : vector<64x128xf32> to vector<64x16xf32>
    %62 = vector.broadcast %60 : vector<64x1xf32> to vector<64x16xf32>
    %63 = arith.mulf %62, %61 : vector<64x16xf32>
    %64 = arith.addf %59, %63 : vector<64x16xf32>
    %65 = vector.extract_strided_slice %30 {offsets = [0, 7], sizes = [64, 1], strides = [1, 1]} : vector<64x8xf32> to vector<64x1xf32>
    %66 = vector.extract_strided_slice %15 {offsets = [0, 112], sizes = [64, 16], strides = [1, 1]} : vector<64x128xf32> to vector<64x16xf32>
    %67 = vector.broadcast %65 : vector<64x1xf32> to vector<64x16xf32>
    %68 = arith.mulf %67, %66 : vector<64x16xf32>
    %69 = arith.addf %64, %68 : vector<64x16xf32>
    %c0_16 = arith.constant 0 : index
    %c0_17 = arith.constant 0 : index
    %70 = vector.load %arg7[%c0_16, %c0_17] : memref<64x16xf32, #tpu.memory_space<vmem>>, vector<64x16xf32>
    tpu.vector_store %arg7[%c0_16, %c0_17], %69 {strides = array<i32>} : memref<64x16xf32, #tpu.memory_space<vmem>>, vector<64x16xf32>,
    return
  }
  func.func @transform_0(%arg0: i32) -> (i32, i32) {
    %c0_i32 = arith.constant 0 : i32
    %c0_i32_0 = arith.constant 0 : i32
    return %arg0, %c0_i32 : i32, i32
  }
  func.func @transform_1(%arg0: i32) -> (i32, i32) {
    %c0_i32 = arith.constant 0 : i32
    %c0_i32_0 = arith.constant 0 : i32
    return %arg0, %c0_i32 : i32, i32
  }
  func.func @transform_2(%arg0: i32) -> (i32, i32) {
    %c0_i32 = arith.constant 0 : i32
    %c0_i32_0 = arith.constant 0 : i32
    %c0_i32_1 = arith.constant 0 : i32
    return %c0_i32, %c0_i32_0 : i32, i32
  }
  func.func @transform_3(%arg0: i32) -> (i32, i32) {
    %c0_i32 = arith.constant 0 : i32
    %c0_i32_0 = arith.constant 0 : i32
    %c0_i32_1 = arith.constant 0 : i32
    return %c0_i32, %c0_i32_0 : i32, i32
  }
  func.func @transform_4(%arg0: i32) -> (i32, i32) {
    %c0_i32 = arith.constant 0 : i32
    %c0_i32_0 = arith.constant 0 : i32
    %c0_i32_1 = arith.constant 0 : i32
    return %c0_i32, %c0_i32_0 : i32, i32
  }
  func.func @transform_5(%arg0: i32) -> (i32, i32) {
    %c0_i32 = arith.constant 0 : i32
    %c0_i32_0 = arith.constant 0 : i32
    %c0_i32_1 = arith.constant 0 : i32
    return %c0_i32, %c0_i32_0 : i32, i32
  }
  func.func @transform_6(%arg0: i32) -> (i32, i32) {
    %c0_i32 = arith.constant 0 : i32
    %c0_i32_0 = arith.constant 0 : i32
    return %arg0, %c0_i32 : i32, i32
  }
}

</mosaic_0001>

<llo_original>
// kernel: simple_multi_view_head.1
$region0: #{simple_multi_view_head.1}
  #allocation0 [shape = 'u32[]', space=smem, size = 0x4, offset = 0x4, fixed_abs, tag = 'smem constant byte address 0x4 - core index']
  #allocation1 [shape = 'u32[144,128]{1,0:T(1,128)}', space=vmem, size = 0x12000, scoped, tag = 'internal scratch']
  %s0 = inlined_call_operand.vmem [shape: f32[96,256], index: 0, kind: input, shape index: {}]
  %s1 = inlined_call_operand.vmem [shape: s8[96,8], index: 1, kind: input, shape index: {}]
  %s2 = inlined_call_operand.vmem [shape: bf16[256,512], index: 2, kind: input, shape index: {}]
  %s3 = inlined_call_operand.vmem [shape: f32[1,512], index: 3, kind: input, shape index: {}]
  %s4 = inlined_call_operand.vmem [shape: bf16[512,136], index: 4, kind: input, shape index: {}]
  %s5 = inlined_call_operand.vmem [shape: f32[1,136], index: 5, kind: input, shape index: {}]
  %s6 = inlined_call_operand.vmem [shape: f32[96,16], index: 6, kind: output, shape index: {}]
  %s7 = sld [smem:[#allocation0]]
  $region105: #{simple_multi_view_head.1} parent=0
    _
  %s9 = ssub.s32 1, %s7
  %s10 = scalar_select 0, %s9, %s7
  $region1: #{simple_multi_view_head.1} parent=0
    #allocation2 [shape = 'u8[65536]{0}', space=vmem, size = 0x10000, scoped, tag = 'output window, operand 0']
    loop: start=0, step=1, limit=4
    $region2: #{simple_multi_view_head.1} parent=1 // loop_pre_header
      _
    $region3: #{simple_multi_view_head.1} parent=1 // loop_header
      %s12 = sphi 0, %s16
      %p13 = scmp.ge.s32.totalorder %s12, 4
      %s22 = sphi 0, %s24
      %s25 = sphi 0, %s22
      %s26 = sphi 0, %s25
      %s42 = sphi 0, %s26
      %s48 = sphi 0, %s50
      %s51 = sphi 0, %s48
      %s52 = sphi 0, %s51
      %s68 = sphi 0, %s52
      %s72 = sphi 0, %s72
      %s74 = sphi 0, %s72
      %s75 = sphi 0, %s74
      %s89 = sphi 0, %s75
      %s93 = sphi 0, %s93
      %s95 = sphi 0, %s93
      %s96 = sphi 0, %s95
      %s110 = sphi 0, %s96
      %s114 = sphi 0, %s114
      %s116 = sphi 0, %s114
      %s117 = sphi 0, %s116
      %s131 = sphi 0, %s117
      %s135 = sphi 0, %s135
      %s137 = sphi 0, %s135
      %s138 = sphi 0, %s137
      %s152 = sphi 0, %s138
      %s158 = sphi 0, %s160
      %s161 = sphi 0, %s158
      %s162 = sphi 0, %s161
      %s178 = sphi 0, %s162
    $region4: #{simple_multi_view_head.1} parent=1 // loop_header_branch
      %15 = sbr.rel (%p13) target = $region8
    $region5: #{simple_multi_view_head.1} parent=1 // loop_body
      %s17 = ssub.s32 %s12, 1
      %s18 = ssub.s32 %s12, 2
      %s19 = sadd.s32 %s12, 1
      %s20 = ssub.s32 %s12, %s19
      %p21 = scmp.eq.s32.totalorder %s20, 0
      %s23 = sadd.s32 %s22, 1
      %s24 = scalar_select %p21, %s22, %s23
      %p27 = pneg %p21
      %p28 = scmp.eq.s32.totalorder %s12, 1
      %p29 = por %p27, %p28
      %p30 = scmp.ne.s32.totalorder %s22, %s25
      %p31 = scmp.eq.s32.totalorder %s12, 0
      %p32 = por %p30, %p31
      %p33 = scmp.ne.s32.totalorder %s22, %s25
      %p34 = scmp.eq.s32.totalorder %s17, 1
      %p35 = por %p33, %p34
      %p36 = scmp.ne.s32.totalorder %s25, %s26
      %p37 = scmp.eq.s32.totalorder %s17, 0
      %p38 = por %p36, %p37
      %p39 = scmp.ne.s32.totalorder %s25, %s26
      %p40 = scmp.eq.s32.totalorder %s18, 1
      %p41 = por %p39, %p40
      %p43 = scmp.ne.s32.totalorder %s26, %s42
      %p44 = scmp.eq.s32.totalorder %s18, 0
      %p45 = por %p43, %p44
      %s46 = ssub.s32 %s12, %s19
      %p47 = scmp.eq.s32.totalorder %s46, 0
      %s49 = sadd.s32 %s48, 1
      %s50 = scalar_select %p47, %s48, %s49
      %p53 = pneg %p47
      %p54 = scmp.eq.s32.totalorder %s12, 1
      %p55 = por %p53, %p54
      %p56 = scmp.ne.s32.totalorder %s48, %s51
      %p57 = scmp.eq.s32.totalorder %s12, 0
      %p58 = por %p56, %p57
      %p59 = scmp.ne.s32.totalorder %s48, %s51
      %p60 = scmp.eq.s32.totalorder %s17, 1
      %p61 = por %p59, %p60
      %p62 = scmp.ne.s32.totalorder %s51, %s52
      %p63 = scmp.eq.s32.totalorder %s17, 0
      %p64 = por %p62, %p63
      %p65 = scmp.ne.s32.totalorder %s51, %s52
      %p66 = scmp.eq.s32.totalorder %s18, 1
      %p67 = por %p65, %p66
      %p69 = scmp.ne.s32.totalorder %s52, %s68
      %p70 = scmp.eq.s32.totalorder %s18, 0
      %p71 = por %p69, %p70
      %s73 = sadd.s32 %s72, 1
      %p76 = scmp.eq.s32.totalorder %s12, 1
      %p77 = scmp.ne.s32.totalorder %s72, %s74
      %p78 = scmp.eq.s32.totalorder %s12, 0
      %p79 = por %p77, %p78
      %p80 = scmp.ne.s32.totalorder %s72, %s74
      %p81 = scmp.eq.s32.totalorder %s17, 1
      %p82 = por %p80, %p81
      %p83 = scmp.ne.s32.totalorder %s74, %s75
      %p84 = scmp.eq.s32.totalorder %s17, 0
      %p85 = por %p83, %p84
      %p86 = scmp.ne.s32.totalorder %s74, %s75
      %p87 = scmp.eq.s32.totalorder %s18, 1
      %p88 = por %p86, %p87
      %p90 = scmp.ne.s32.totalorder %s75, %s89
      %p91 = scmp.eq.s32.totalorder %s18, 0
      %p92 = por %p90, %p91
      %s94 = sadd.s32 %s93, 1
      %p97 = scmp.eq.s32.totalorder %s12, 1
      %p98 = scmp.ne.s32.totalorder %s93, %s95
      %p99 = scmp.eq.s32.totalorder %s12, 0
      %p100 = por %p98, %p99
      %p101 = scmp.ne.s32.totalorder %s93, %s95
      %p102 = scmp.eq.s32.totalorder %s17, 1
      %p103 = por %p101, %p102
      %p104 = scmp.ne.s32.totalorder %s95, %s96
      %p105 = scmp.eq.s32.totalorder %s17, 0
      %p106 = por %p104, %p105
      %p107 = scmp.ne.s32.totalorder %s95, %s96
      %p108 = scmp.eq.s32.totalorder %s18, 1
      %p109 = por %p107, %p108
      %p111 = scmp.ne.s32.totalorder %s96, %s110
      %p112 = scmp.eq.s32.totalorder %s18, 0
      %p113 = por %p111, %p112
      %s115 = sadd.s32 %s114, 1
      %p118 = scmp.eq.s32.totalorder %s12, 1
      %p119 = scmp.ne.s32.totalorder %s114, %s116
      %p120 = scmp.eq.s32.totalorder %s12, 0
      %p121 = por %p119, %p120
      %p122 = scmp.ne.s32.totalorder %s114, %s116
      %p123 = scmp.eq.s32.totalorder %s17, 1
      %p124 = por %p122, %p123
      %p125 = scmp.ne.s32.totalorder %s116, %s117
      %p126 = scmp.eq.s32.totalorder %s17, 0
      %p127 = por %p125, %p126
      %p128 = scmp.ne.s32.totalorder %s116, %s117
      %p129 = scmp.eq.s32.totalorder %s18, 1
      %p130 = por %p128, %p129
      %p132 = scmp.ne.s32.totalorder %s117, %s131
      %p133 = scmp.eq.s32.totalorder %s18, 0
      %p134 = por %p132, %p133
      %s136 = sadd.s32 %s135, 1
      %p139 = scmp.eq.s32.totalorder %s12, 1
      %p140 = scmp.ne.s32.totalorder %s135, %s137
      %p141 = scmp.eq.s32.totalorder %s12, 0
      %p142 = por %p140, %p141
      %p143 = scmp.ne.s32.totalorder %s135, %s137
      %p144 = scmp.eq.s32.totalorder %s17, 1
      %p145 = por %p143, %p144
      %p146 = scmp.ne.s32.totalorder %s137, %s138
      %p147 = scmp.eq.s32.totalorder %s17, 0
      %p148 = por %p146, %p147
      %p149 = scmp.ne.s32.totalorder %s137, %s138
      %p150 = scmp.eq.s32.totalorder %s18, 1
      %p151 = por %p149, %p150
      %p153 = scmp.ne.s32.totalorder %s138, %s152
      %p154 = scmp.eq.s32.totalorder %s18, 0
      %p155 = por %p153, %p154
      %s156 = ssub.s32 %s12, %s19
      %p157 = scmp.eq.s32.totalorder %s156, 0
      %s159 = sadd.s32 %s158, 1
      %s160 = scalar_select %p157, %s158, %s159
      %p163 = pneg %p157
      %p164 = scmp.eq.s32.totalorder %s12, 1
      %p165 = por %p163, %p164
      %p166 = scmp.ne.s32.totalorder %s158, %s161
      %p167 = scmp.eq.s32.totalorder %s12, 0
      %p168 = por %p166, %p167
      %p169 = scmp.ne.s32.totalorder %s158, %s161
      %p170 = scmp.eq.s32.totalorder %s17, 1
      %p171 = por %p169, %p170
      %p172 = scmp.ne.s32.totalorder %s161, %s162
      %p173 = scmp.eq.s32.totalorder %s17, 0
      %p174 = por %p172, %p173
      %p175 = scmp.ne.s32.totalorder %s161, %s162
      %p176 = scmp.eq.s32.totalorder %s18, 1
      %p177 = por %p175, %p176
      %p179 = scmp.ne.s32.totalorder %s162, %s178
      %p180 = scmp.eq.s32.totalorder %s18, 0
      %p181 = por %p179, %p180
      %p182 = scmp.le.s32.totalorder 1, %s12
      %p183 = scmp.lt.s32.totalorder %s12, 3
      %p184 = pnand %p182, %p183
      %p185 = pneg %p184
      // Predicated region
      $region9: #{simple_multi_view_head.1} parent=5 // pred_check
        _
      $region10: #{simple_multi_view_head.1} parent=5 // pred_check_branch
        %187 = sbr.rel (%p184) target = $region12
      $region11: #{simple_multi_view_head.1} parent=5 // pred_region
        %s188 = ssub.s32 %s12, 1
        // Predicated region
        $region13: #{simple_multi_view_head.1} parent=11 // pred_check
          %p189 = pneg %p85
        $region14: #{simple_multi_view_head.1} parent=11 // pred_check_branch
          %191 = sbr.rel (%p189) target = $region16
        $region15: #{simple_multi_view_head.1} parent=11 // pred_region
          _
        $region16: #{simple_multi_view_head.1} parent=11 // pred_fallthru
          _
        // Predicated region
        $region17: #{simple_multi_view_head.1} parent=11 // pred_check
          %p192 = pneg %p106
        $region18: #{simple_multi_view_head.1} parent=11 // pred_check_branch
          %194 = sbr.rel (%p192) target = $region20
        $region19: #{simple_multi_view_head.1} parent=11 // pred_region
          _
        $region20: #{simple_multi_view_head.1} parent=11 // pred_fallthru
          _
        // Predicated region
        $region21: #{simple_multi_view_head.1} parent=11 // pred_check
          %p195 = pneg %p127
        $region22: #{simple_multi_view_head.1} parent=11 // pred_check_branch
          %197 = sbr.rel (%p195) target = $region24
        $region23: #{simple_multi_view_head.1} parent=11 // pred_region
          _
        $region24: #{simple_multi_view_head.1} parent=11 // pred_fallthru
          _
        // Predicated region
        $region25: #{simple_multi_view_head.1} parent=11 // pred_check
          %p198 = pneg %p148
        $region26: #{simple_multi_view_head.1} parent=11 // pred_check_branch
          %200 = sbr.rel (%p198) target = $region28
        $region27: #{simple_multi_view_head.1} parent=11 // pred_region
          _
        $region28: #{simple_multi_view_head.1} parent=11 // pred_fallthru
          _
      $region12: #{simple_multi_view_head.1} parent=5 // pred_fallthru
        _
      %p201 = scmp.lt.s32.totalorder %s12, 2
      // Predicated region
      $region29: #{simple_multi_view_head.1} parent=5 // pred_check
        %p202 = pneg %p201
      $region30: #{simple_multi_view_head.1} parent=5 // pred_check_branch
        %204 = sbr.rel (%p202) target = $region32
      $region31: #{simple_multi_view_head.1} parent=5 // pred_region
        // Predicated region
        $region33: #{simple_multi_view_head.1} parent=31 // pred_check
          %p205 = pneg %p32
        $region34: #{simple_multi_view_head.1} parent=31 // pred_check_branch
          %207 = sbr.rel (%p205) target = $region36
        $region35: #{simple_multi_view_head.1} parent=31 // pred_region
          %s208 = smul.u32 8, %s12
          %s209 = ssub.s32 12, %s208
          %p210 = scmp.lt.s32.totalorder %s209, 8
          %s211 = scalar_select %p210, %s209, 8
          %s212 = smul.u32 128, %s211
          %s213 = smul.u32 %s212, 2
          %p214 = scmp.lt.s32.totalorder %s208, 11
          %s215 = scalar_select %p214, %s208, 11
          %s216 = smul.addr %s215, 2
          %s217 = smul.addr %s216, 8
          %s218 = scalar_lea.vmem %s0, %s217
          %s219 = smul.u32 8, %s12
          %s220 = ssub.s32 12, %s219
          %p221 = scmp.lt.s32.totalorder %s220, 8
          %s222 = scalar_select %p221, %s220, 8
          %s223 = smul.u32 128, %s222
          %s224 = smul.u32 %s223, 2
        $region36: #{simple_multi_view_head.1} parent=31 // pred_fallthru
          _
        // Predicated region
        $region37: #{simple_multi_view_head.1} parent=31 // pred_check
          %p225 = pneg %p58
        $region38: #{simple_multi_view_head.1} parent=31 // pred_check_branch
          %227 = sbr.rel (%p225) target = $region40
        $region39: #{simple_multi_view_head.1} parent=31 // pred_region
          %s228 = smul.u32 8, %s12
          %s229 = ssub.s32 12, %s228
          %p230 = scmp.lt.s32.totalorder %s229, 8
          %s231 = scalar_select %p230, %s229, 8
          %s232 = smul.u32 32, %s231
          %p233 = scmp.lt.s32.totalorder %s228, 11
          %s234 = scalar_select %p233, %s228, 11
          %s235 = smul.addr %s234, 2
          %s236 = scalar_lea.vmem %s1, %s235
          %s237 = smul.u32 8, %s12
          %s238 = ssub.s32 12, %s237
          %p239 = scmp.lt.s32.totalorder %s238, 8
          %s240 = scalar_select %p239, %s238, 8
          %s241 = smul.u32 32, %s240
        $region40: #{simple_multi_view_head.1} parent=31 // pred_fallthru
          _
      $region32: #{simple_multi_view_head.1} parent=5 // pred_fallthru
        _
      %p242 = scmp.le.s32.totalorder 1, %s12
      %p243 = scmp.lt.s32.totalorder %s12, 3
      %p244 = pnand %p242, %p243
      %p245 = pneg %p244
      // Predicated region
      $region41: #{simple_multi_view_head.1} parent=5 // pred_check
        _
      $region42: #{simple_multi_view_head.1} parent=5 // pred_check_branch
        %247 = sbr.rel (%p244) target = $region44
      $region43: #{simple_multi_view_head.1} parent=5 // pred_region
        %s248 = ssub.s32 %s12, 1
        %s249 = smul.u32 8, %s17
        %s250 = ssub.s32 12, %s249
        %p251 = scmp.lt.s32.totalorder %s250, 8
        %s252 = scalar_select %p251, %s250, 8
        %s253 = smul.u32 128, %s252
        %s254 = smul.u32 %s253, 2
        %p255 = scmp.lt.s32.totalorder %s249, 11
        %s256 = scalar_select %p255, %s249, 11
        %s257 = smul.addr %s256, 2
        %s258 = smul.addr %s257, 8
        %s259 = scalar_lea.vmem %s0, %s258
        %p260 = pneg %p38
        %p261 = pneg %p35
        %s262 = smul.u32 8, %s17
        %s263 = ssub.s32 12, %s262
        %p264 = scmp.lt.s32.totalorder %s263, 8
        %s265 = scalar_select %p264, %s263, 8
        %s266 = smul.u32 32, %s265
        %p267 = scmp.lt.s32.totalorder %s262, 11
        %s268 = scalar_select %p267, %s262, 11
        %s269 = smul.addr %s268, 2
        %s270 = scalar_lea.vmem %s1, %s269
        %p271 = pneg %p64
        %p272 = pneg %p61
        %p273 = pneg %p85
        %p274 = pneg %p82
        %p275 = pneg %p106
        %p276 = pneg %p103
        %p277 = pneg %p127
        %p278 = pneg %p124
        %p279 = pneg %p148
        %p280 = pneg %p145
        %p281 = pneg %p174
        %p282 = pneg %p171
        %s283 = sand.u32 %s161, 1
        %s284 = sand.u32 %s161, 1
        %s285 = smul.addr %s284, 64
        %s286 = scalar_lea.vmem [#allocation2], %s285
        %s287 = smul.u32 8, %s17
        %s288 = ssub.s32 12, %s287
        %p289 = scmp.lt.s32.totalorder %s288, 8
        %s290 = scalar_select %p289, %s288, 8
        %s291 = smul.u32 128, %s290
        %s292 = smul.u32 %s291, 2
        %p293 = scmp.lt.s32.totalorder %s287, 11
        %s294 = scalar_select %p293, %s287, 11
        %s295 = smul.addr %s294, 2
        %s296 = smul.addr %s295, 8
        %s297 = scalar_lea.vmem %s0, %s296
        %s298 = smul.u32 8, %s17
        %s299 = ssub.s32 12, %s298
        %p300 = scmp.lt.s32.totalorder %s299, 8
        %s301 = scalar_select %p300, %s299, 8
        %s302 = smul.u32 128, %s301
        %s303 = smul.u32 %s302, 2
        %s304 = smul.u32 8, %s17
        %s305 = ssub.s32 12, %s304
        %p306 = scmp.lt.s32.totalorder %s305, 8
        %s307 = scalar_select %p306, %s305, 8
        %s308 = smul.u32 32, %s307
        %p309 = scmp.lt.s32.totalorder %s304, 11
        %s310 = scalar_select %p309, %s304, 11
        %s311 = smul.addr %s310, 2
        %s312 = scalar_lea.vmem %s1, %s311
        %s313 = smul.u32 8, %s17
        %s314 = ssub.s32 12, %s313
        %p315 = scmp.lt.s32.totalorder %s314, 8
        %s316 = scalar_select %p315, %s314, 8
        %s317 = smul.u32 32, %s316
        %s318 = smul.u32 8, %s17
        %s319 = ssub.s32 12, %s318
        %p320 = scmp.lt.s32.totalorder %s319, 8
        %s321 = scalar_select %p320, %s319, 8
        %s322 = smul.u32 128, %s321
        %v325 = vld [vmem:[%s297] sm:$0xff]
        %v326 = vld [vmem:[%s297 + $0x8] sm:$0xff]
        %v327 = vld [vmem:[%s297 + $0x10] sm:$0xff]
        %v328 = vld [vmem:[%s297 + $0x18] sm:$0xff]
        %v329 = vld [vmem:[%s297 + $0x20] sm:$0xff]
        %v330 = vld [vmem:[%s297 + $0x28] sm:$0xff]
        %v331 = vld [vmem:[%s297 + $0x30] sm:$0xff]
        %v332 = vld [vmem:[%s297 + $0x38] sm:$0xff]
        %v333 = vld [vmem:[%s297 + $0x40] sm:$0xff]
        %v334 = vld [vmem:[%s297 + $0x48] sm:$0xff]
        %v335 = vld [vmem:[%s297 + $0x50] sm:$0xff]
        %v336 = vld [vmem:[%s297 + $0x58] sm:$0xff]
        %v337 = vld [vmem:[%s297 + $0x60] sm:$0xff]
        %v338 = vld [vmem:[%s297 + $0x68] sm:$0xff]
        %v339 = vld [vmem:[%s297 + $0x70] sm:$0xff]
        %v340 = vld [vmem:[%s297 + $0x78] sm:$0xff]
        %v341 = vpack.c.bf16 %v327, %v325
        %v342 = vpack.c.bf16 %v328, %v326
        %v343 = vpack.c.bf16 %v331, %v329
        %v344 = vpack.c.bf16 %v332, %v330
        %v345 = vpack.c.bf16 %v335, %v333
        %v346 = vpack.c.bf16 %v336, %v334
        %v347 = vpack.c.bf16 %v339, %v337
        %v348 = vpack.c.bf16 %v340, %v338
        %v349 = vld [vmem:[%s2] sm:$0xff]
        %v350 = vld [vmem:[%s2 + $0x8] sm:$0xff]
        %v351 = vld [vmem:[%s2 + $0x10] sm:$0xff]
        %v352 = vld [vmem:[%s2 + $0x18] sm:$0xff]
        %v353 = vld [vmem:[%s2 + $0x20] sm:$0xff]
        %v354 = vld [vmem:[%s2 + $0x28] sm:$0xff]
        %v355 = vld [vmem:[%s2 + $0x30] sm:$0xff]
        %v356 = vld [vmem:[%s2 + $0x38] sm:$0xff]
        %v357 = vld [vmem:[%s2 + $0x40] sm:$0xff]
        %v358 = vld [vmem:[%s2 + $0x48] sm:$0xff]
        %v359 = vld [vmem:[%s2 + $0x50] sm:$0xff]
        %v360 = vld [vmem:[%s2 + $0x58] sm:$0xff]
        %v361 = vld [vmem:[%s2 + $0x60] sm:$0xff]
        %v362 = vld [vmem:[%s2 + $0x68] sm:$0xff]
        %v363 = vld [vmem:[%s2 + $0x70] sm:$0xff]
        %v364 = vld [vmem:[%s2 + $0x78] sm:$0xff]
        %v365 = vld [vmem:[%s2 + $0x80] sm:$0xff]
        %v366 = vld [vmem:[%s2 + $0x88] sm:$0xff]
        %v367 = vld [vmem:[%s2 + $0x90] sm:$0xff]
        %v368 = vld [vmem:[%s2 + $0x98] sm:$0xff]
        %v369 = vld [vmem:[%s2 + $0xa0] sm:$0xff]
        %v370 = vld [vmem:[%s2 + $0xa8] sm:$0xff]
        %v371 = vld [vmem:[%s2 + $0xb0] sm:$0xff]
        %v372 = vld [vmem:[%s2 + $0xb8] sm:$0xff]
        %v373 = vld [vmem:[%s2 + $0xc0] sm:$0xff]
        %v374 = vld [vmem:[%s2 + $0xc8] sm:$0xff]
        %v375 = vld [vmem:[%s2 + $0xd0] sm:$0xff]
        %v376 = vld [vmem:[%s2 + $0xd8] sm:$0xff]
        %v377 = vld [vmem:[%s2 + $0xe0] sm:$0xff]
        %v378 = vld [vmem:[%s2 + $0xe8] sm:$0xff]
        %v379 = vld [vmem:[%s2 + $0xf0] sm:$0xff]
        %v380 = vld [vmem:[%s2 + $0xf8] sm:$0xff]
        %v381 = vld [vmem:[%s2 + $0x100] sm:$0xff]
        %v382 = vld [vmem:[%s2 + $0x108] sm:$0xff]
        %v383 = vld [vmem:[%s2 + $0x110] sm:$0xff]
        %v384 = vld [vmem:[%s2 + $0x118] sm:$0xff]
        %v385 = vld [vmem:[%s2 + $0x120] sm:$0xff]
        %v386 = vld [vmem:[%s2 + $0x128] sm:$0xff]
        %v387 = vld [vmem:[%s2 + $0x130] sm:$0xff]
        %v388 = vld [vmem:[%s2 + $0x138] sm:$0xff]
        %v389 = vld [vmem:[%s2 + $0x140] sm:$0xff]
        %v390 = vld [vmem:[%s2 + $0x148] sm:$0xff]
        %v391 = vld [vmem:[%s2 + $0x150] sm:$0xff]
        %v392 = vld [vmem:[%s2 + $0x158] sm:$0xff]
        %v393 = vld [vmem:[%s2 + $0x160] sm:$0xff]
        %v394 = vld [vmem:[%s2 + $0x168] sm:$0xff]
        %v395 = vld [vmem:[%s2 + $0x170] sm:$0xff]
        %v396 = vld [vmem:[%s2 + $0x178] sm:$0xff]
        %v397 = vld [vmem:[%s2 + $0x180] sm:$0xff]
        %v398 = vld [vmem:[%s2 + $0x188] sm:$0xff]
        %v399 = vld [vmem:[%s2 + $0x190] sm:$0xff]
        %v400 = vld [vmem:[%s2 + $0x198] sm:$0xff]
        %v401 = vld [vmem:[%s2 + $0x1a0] sm:$0xff]
        %v402 = vld [vmem:[%s2 + $0x1a8] sm:$0xff]
        %v403 = vld [vmem:[%s2 + $0x1b0] sm:$0xff]
        %v404 = vld [vmem:[%s2 + $0x1b8] sm:$0xff]
        %v405 = vld [vmem:[%s2 + $0x1c0] sm:$0xff]
        %v406 = vld [vmem:[%s2 + $0x1c8] sm:$0xff]
        %v407 = vld [vmem:[%s2 + $0x1d0] sm:$0xff]
        %v408 = vld [vmem:[%s2 + $0x1d8] sm:$0xff]
        %v409 = vld [vmem:[%s2 + $0x1e0] sm:$0xff]
        %v410 = vld [vmem:[%s2 + $0x1e8] sm:$0xff]
        %v411 = vld [vmem:[%s2 + $0x1f0] sm:$0xff]
        %v412 = vld [vmem:[%s2 + $0x1f8] sm:$0xff]
        %v413 = vld [vmem:[%s3] sm:$0xf]
        %v415 = vlaneseq
        %v416 = vshrl.u32 %v415, 7
        %v417 = vsub.s32 0, %v416
        %v418 = vrot.slane %v413, %v417
        %v419 = vlaneseq
        %v420 = vshrl.u32 %v419, 7
        %v421 = vsub.s32 1, %v420
        %v422 = vrot.slane %v413, %v421
        %v423 = vlaneseq
        %v424 = vshrl.u32 %v423, 7
        %v425 = vsub.s32 2, %v424
        %v426 = vrot.slane %v413, %v425
        %v427 = vlaneseq
        %v428 = vshrl.u32 %v427, 7
        %v429 = vsub.s32 3, %v428
        %v430 = vrot.slane %v413, %v429
        %v499 = vunpack.c.l.b16 %v349
        %v500 = vunpack.c.h.b16 %v349
        %v501 = vunpack.c.l.b16 %v350
        %v502 = vunpack.c.h.b16 %v350
        %v503 = vunpack.c.l.b16 %v351
        %v504 = vunpack.c.h.b16 %v351
        %v505 = vunpack.c.l.b16 %v352
        %v506 = vunpack.c.h.b16 %v352
        %v507 = vunpack.c.l.b16 %v353
        %v508 = vunpack.c.h.b16 %v353
        %v509 = vunpack.c.l.b16 %v354
        %v510 = vunpack.c.h.b16 %v354
        %v511 = vunpack.c.l.b16 %v355
        %v512 = vunpack.c.h.b16 %v355
        %v513 = vunpack.c.l.b16 %v356
        %v514 = vunpack.c.h.b16 %v356
        %v515 = vunpack.c.l.b16 %v357
        %v516 = vunpack.c.h.b16 %v357
        %v517 = vunpack.c.l.b16 %v358
        %v518 = vunpack.c.h.b16 %v358
        %v519 = vunpack.c.l.b16 %v359
        %v520 = vunpack.c.h.b16 %v359
        %v521 = vunpack.c.l.b16 %v360
        %v522 = vunpack.c.h.b16 %v360
        %v523 = vunpack.c.l.b16 %v361
        %v524 = vunpack.c.h.b16 %v361
        %v525 = vunpack.c.l.b16 %v362
        %v526 = vunpack.c.h.b16 %v362
        %v527 = vunpack.c.l.b16 %v363
        %v528 = vunpack.c.h.b16 %v363
        %v529 = vunpack.c.l.b16 %v364
        %v530 = vunpack.c.h.b16 %v364
        %v531 = vunpack.c.l.b16 %v365
        %v532 = vunpack.c.h.b16 %v365
        %v533 = vunpack.c.l.b16 %v366
        %v534 = vunpack.c.h.b16 %v366
        %v535 = vunpack.c.l.b16 %v367
        %v536 = vunpack.c.h.b16 %v367
        %v537 = vunpack.c.l.b16 %v368
        %v538 = vunpack.c.h.b16 %v368
        %v539 = vunpack.c.l.b16 %v369
        %v540 = vunpack.c.h.b16 %v369
        %v541 = vunpack.c.l.b16 %v370
        %v542 = vunpack.c.h.b16 %v370
        %v543 = vunpack.c.l.b16 %v371
        %v544 = vunpack.c.h.b16 %v371
        %v545 = vunpack.c.l.b16 %v372
        %v546 = vunpack.c.h.b16 %v372
        %v547 = vunpack.c.l.b16 %v373
        %v548 = vunpack.c.h.b16 %v373
        %v549 = vunpack.c.l.b16 %v374
        %v550 = vunpack.c.h.b16 %v374
        %v551 = vunpack.c.l.b16 %v375
        %v552 = vunpack.c.h.b16 %v375
        %v553 = vunpack.c.l.b16 %v376
        %v554 = vunpack.c.h.b16 %v376
        %v555 = vunpack.c.l.b16 %v377
        %v556 = vunpack.c.h.b16 %v377
        %v557 = vunpack.c.l.b16 %v378
        %v558 = vunpack.c.h.b16 %v378
        %v559 = vunpack.c.l.b16 %v379
        %v560 = vunpack.c.h.b16 %v379
        %v561 = vunpack.c.l.b16 %v380
        %v562 = vunpack.c.h.b16 %v380
        %v563 = vunpack.c.l.b16 %v381
        %v564 = vunpack.c.h.b16 %v381
        %v565 = vunpack.c.l.b16 %v382
        %v566 = vunpack.c.h.b16 %v382
        %v567 = vunpack.c.l.b16 %v383
        %v568 = vunpack.c.h.b16 %v383
        %v569 = vunpack.c.l.b16 %v384
        %v570 = vunpack.c.h.b16 %v384
        %v571 = vunpack.c.l.b16 %v385
        %v572 = vunpack.c.h.b16 %v385
        %v573 = vunpack.c.l.b16 %v386
        %v574 = vunpack.c.h.b16 %v386
        %v575 = vunpack.c.l.b16 %v387
        %v576 = vunpack.c.h.b16 %v387
        %v577 = vunpack.c.l.b16 %v388
        %v578 = vunpack.c.h.b16 %v388
        %v579 = vunpack.c.l.b16 %v389
        %v580 = vunpack.c.h.b16 %v389
        %v581 = vunpack.c.l.b16 %v390
        %v582 = vunpack.c.h.b16 %v390
        %v583 = vunpack.c.l.b16 %v391
        %v584 = vunpack.c.h.b16 %v391
        %v585 = vunpack.c.l.b16 %v392
        %v586 = vunpack.c.h.b16 %v392
        %v587 = vunpack.c.l.b16 %v393
        %v588 = vunpack.c.h.b16 %v393
        %v589 = vunpack.c.l.b16 %v394
        %v590 = vunpack.c.h.b16 %v394
        %v591 = vunpack.c.l.b16 %v395
        %v592 = vunpack.c.h.b16 %v395
        %v593 = vunpack.c.l.b16 %v396
        %v594 = vunpack.c.h.b16 %v396
        %v595 = vunpack.c.l.b16 %v397
        %v596 = vunpack.c.h.b16 %v397
        %v597 = vunpack.c.l.b16 %v398
        %v598 = vunpack.c.h.b16 %v398
        %v599 = vunpack.c.l.b16 %v399
        %v600 = vunpack.c.h.b16 %v399
        %v601 = vunpack.c.l.b16 %v400
        %v602 = vunpack.c.h.b16 %v400
        %v603 = vunpack.c.l.b16 %v401
        %v604 = vunpack.c.h.b16 %v401
        %v605 = vunpack.c.l.b16 %v402
        %v606 = vunpack.c.h.b16 %v402
        %v607 = vunpack.c.l.b16 %v403
        %v608 = vunpack.c.h.b16 %v403
        %v609 = vunpack.c.l.b16 %v404
        %v610 = vunpack.c.h.b16 %v404
        %v611 = vunpack.c.l.b16 %v405
        %v612 = vunpack.c.h.b16 %v405
        %v613 = vunpack.c.l.b16 %v406
        %v614 = vunpack.c.h.b16 %v406
        %v615 = vunpack.c.l.b16 %v407
        %v616 = vunpack.c.h.b16 %v407
        %v617 = vunpack.c.l.b16 %v408
        %v618 = vunpack.c.h.b16 %v408
        %v619 = vunpack.c.l.b16 %v409
        %v620 = vunpack.c.h.b16 %v409
        %v621 = vunpack.c.l.b16 %v410
        %v622 = vunpack.c.h.b16 %v410
        %v623 = vunpack.c.l.b16 %v411
        %v624 = vunpack.c.h.b16 %v411
        %v625 = vunpack.c.l.b16 %v412
        %v626 = vunpack.c.h.b16 %v412
        %v627 = vpack.c.b16 %v503, %v499
        %v628 = vpack.c.b16 %v504, %v500
        %v629 = vpack.c.b16 %v505, %v501
        %v630 = vpack.c.b16 %v506, %v502
        %v631 = vpack.c.b16 %v511, %v507
        %v632 = vpack.c.b16 %v512, %v508
        %v633 = vpack.c.b16 %v513, %v509
        %v634 = vpack.c.b16 %v514, %v510
        %v635 = vpack.c.b16 %v519, %v515
        %v636 = vpack.c.b16 %v520, %v516
        %v637 = vpack.c.b16 %v521, %v517
        %v638 = vpack.c.b16 %v522, %v518
        %v639 = vpack.c.b16 %v527, %v523
        %v640 = vpack.c.b16 %v528, %v524
        %v641 = vpack.c.b16 %v529, %v525
        %v642 = vpack.c.b16 %v530, %v526
        %v643 = vpack.c.b16 %v535, %v531
        %v644 = vpack.c.b16 %v536, %v532
        %v645 = vpack.c.b16 %v537, %v533
        %v646 = vpack.c.b16 %v538, %v534
        %v647 = vpack.c.b16 %v543, %v539
        %v648 = vpack.c.b16 %v544, %v540
        %v649 = vpack.c.b16 %v545, %v541
        %v650 = vpack.c.b16 %v546, %v542
        %v651 = vpack.c.b16 %v551, %v547
        %v652 = vpack.c.b16 %v552, %v548
        %v653 = vpack.c.b16 %v553, %v549
        %v654 = vpack.c.b16 %v554, %v550
        %v655 = vpack.c.b16 %v559, %v555
        %v656 = vpack.c.b16 %v560, %v556
        %v657 = vpack.c.b16 %v561, %v557
        %v658 = vpack.c.b16 %v562, %v558
        %v659 = vpack.c.b16 %v567, %v563
        %v660 = vpack.c.b16 %v568, %v564
        %v661 = vpack.c.b16 %v569, %v565
        %v662 = vpack.c.b16 %v570, %v566
        %v663 = vpack.c.b16 %v575, %v571
        %v664 = vpack.c.b16 %v576, %v572
        %v665 = vpack.c.b16 %v577, %v573
        %v666 = vpack.c.b16 %v578, %v574
        %v667 = vpack.c.b16 %v583, %v579
        %v668 = vpack.c.b16 %v584, %v580
        %v669 = vpack.c.b16 %v585, %v581
        %v670 = vpack.c.b16 %v586, %v582
        %v671 = vpack.c.b16 %v591, %v587
        %v672 = vpack.c.b16 %v592, %v588
        %v673 = vpack.c.b16 %v593, %v589
        %v674 = vpack.c.b16 %v594, %v590
        %v675 = vpack.c.b16 %v599, %v595
        %v676 = vpack.c.b16 %v600, %v596
        %v677 = vpack.c.b16 %v601, %v597
        %v678 = vpack.c.b16 %v602, %v598
        %v679 = vpack.c.b16 %v607, %v603
        %v680 = vpack.c.b16 %v608, %v604
        %v681 = vpack.c.b16 %v609, %v605
        %v682 = vpack.c.b16 %v610, %v606
        %v683 = vpack.c.b16 %v615, %v611
        %v684 = vpack.c.b16 %v616, %v612
        %v685 = vpack.c.b16 %v617, %v613
        %v686 = vpack.c.b16 %v618, %v614
        %v687 = vpack.c.b16 %v623, %v619
        %v688 = vpack.c.b16 %v624, %v620
        %v689 = vpack.c.b16 %v625, %v621
        %v690 = vpack.c.b16 %v626, %v622
        %755 = vmatprep.subr.bf16.mxu0 %v628
        %756 = vmatpush1.bf16.msra.mxu0 %v627
        %757 = vmatprep.subr.bf16.mxu0 %v632
        %758 = vmatpush1.bf16.msra.mxu0 %v631
        %759 = vmatprep.subr.bf16.mxu0 %v636
        %760 = vmatpush1.bf16.msra.mxu0 %v635
        %761 = vmatprep.subr.bf16.mxu0 %v640
        %762 = vmatpush1.bf16.msra.mxu0 %v639
        %763 = vmatprep.subr.bf16.mxu0 %v644
        %764 = vmatpush1.bf16.msra.mxu0 %v643
        %765 = vmatprep.subr.bf16.mxu0 %v648
        %766 = vmatpush1.bf16.msra.mxu0 %v647
        %767 = vmatprep.subr.bf16.mxu0 %v652
        %768 = vmatpush1.bf16.msra.mxu0 %v651
        %769 = vmatprep.subr.bf16.mxu0 %v656
        %770 = vmatpush1.bf16.msra.mxu0 %v655
        %771 = vmatprep.subr.bf16.mxu0 %v660
        %772 = vmatpush1.bf16.msra.mxu0 %v659
        %773 = vmatprep.subr.bf16.mxu0 %v664
        %774 = vmatpush1.bf16.msra.mxu0 %v663
        %775 = vmatprep.subr.bf16.mxu0 %v668
        %776 = vmatpush1.bf16.msra.mxu0 %v667
        %777 = vmatprep.subr.bf16.mxu0 %v672
        %778 = vmatpush1.bf16.msra.mxu0 %v671
        %779 = vmatprep.subr.bf16.mxu0 %v676
        %780 = vmatpush1.bf16.msra.mxu0 %v675
        %781 = vmatprep.subr.bf16.mxu0 %v680
        %782 = vmatpush1.bf16.msra.mxu0 %v679
        %783 = vmatprep.subr.bf16.mxu0 %v684
        %784 = vmatpush1.bf16.msra.mxu0 %v683
        %785 = vmatprep.subr.bf16.mxu0 %v688
        %786 = vmatpush1.bf16.msra.mxu0 %v687
        %787 = vmatprep.mubr.bf16.mxu0 %v342
        %788 = vmatmul.mubr.bf16.gmra.mrb[0].mxu0 %v341
        %v789 = vpop.f32.mrb[0].mxu0
        %v790 = vadd.f32 %v418, %v789
        %v791 = vpop.f32.mrb[0].mxu0
        %v792 = vadd.f32 %v422, %v791
        %v793 = vpop.f32.mrb[0].mxu0
        %v794 = vadd.f32 %v418, %v793
        %v795 = vpop.f32.mrb[0].mxu0
        %v796 = vadd.f32 %v422, %v795
        %797 = vmatprep.mubr.bf16.mxu0 %v344
        %798 = vmatmul.mubr.bf16.gmra.mrb[0].mxu0 %v343
        %v799 = vpop.f32.mrb[0].mxu0
        %v800 = vadd.f32 %v418, %v799
        %v801 = vpop.f32.mrb[0].mxu0
        %v802 = vadd.f32 %v422, %v801
        %v803 = vpop.f32.mrb[0].mxu0
        %v804 = vadd.f32 %v418, %v803
        %v805 = vpop.f32.mrb[0].mxu0
        %v806 = vadd.f32 %v422, %v805
        %807 = vmatprep.mubr.bf16.mxu0 %v346
        %808 = vmatmul.mubr.bf16.gmra.mrb[0].mxu0 %v345
        %v809 = vpop.f32.mrb[0].mxu0
        %v810 = vadd.f32 %v418, %v809
        %v811 = vpop.f32.mrb[0].mxu0
        %v812 = vadd.f32 %v422, %v811
        %v813 = vpop.f32.mrb[0].mxu0
        %v814 = vadd.f32 %v418, %v813
        %v815 = vpop.f32.mrb[0].mxu0
        %v816 = vadd.f32 %v422, %v815
        %817 = vmatprep.mubr.bf16.mxu0 %v348
        %818 = vmatmul.mubr.bf16.gmra.mrb[0].mxu0 %v347
        %v819 = vpop.f32.mrb[0].mxu0
        %v820 = vadd.f32 %v418, %v819
        %v821 = vpop.f32.mrb[0].mxu0
        %v822 = vadd.f32 %v422, %v821
        %v823 = vpop.f32.mrb[0].mxu0
        %v824 = vadd.f32 %v418, %v823
        %v825 = vpop.f32.mrb[0].mxu0
        %v826 = vadd.f32 %v422, %v825
        %827 = vdwg.mxu0
        %828 = vmatprep.subr.bf16.mxu0 %v630
        %829 = vmatpush1.bf16.msra.mxu0 %v629
        %830 = vmatprep.subr.bf16.mxu0 %v634
        %831 = vmatpush1.bf16.msra.mxu0 %v633
        %832 = vmatprep.subr.bf16.mxu0 %v638
        %833 = vmatpush1.bf16.msra.mxu0 %v637
        %834 = vmatprep.subr.bf16.mxu0 %v642
        %835 = vmatpush1.bf16.msra.mxu0 %v641
        %836 = vmatprep.subr.bf16.mxu0 %v646
        %837 = vmatpush1.bf16.msra.mxu0 %v645
        %838 = vmatprep.subr.bf16.mxu0 %v650
        %839 = vmatpush1.bf16.msra.mxu0 %v649
        %840 = vmatprep.subr.bf16.mxu0 %v654
        %841 = vmatpush1.bf16.msra.mxu0 %v653
        %842 = vmatprep.subr.bf16.mxu0 %v658
        %843 = vmatpush1.bf16.msra.mxu0 %v657
        %844 = vmatprep.subr.bf16.mxu0 %v662
        %845 = vmatpush1.bf16.msra.mxu0 %v661
        %846 = vmatprep.subr.bf16.mxu0 %v666
        %847 = vmatpush1.bf16.msra.mxu0 %v665
        %848 = vmatprep.subr.bf16.mxu0 %v670
        %849 = vmatpush1.bf16.msra.mxu0 %v669
        %850 = vmatprep.subr.bf16.mxu0 %v674
        %851 = vmatpush1.bf16.msra.mxu0 %v673
        %852 = vmatprep.subr.bf16.mxu0 %v678
        %853 = vmatpush1.bf16.msra.mxu0 %v677
        %854 = vmatprep.subr.bf16.mxu0 %v682
        %855 = vmatpush1.bf16.msra.mxu0 %v681
        %856 = vmatprep.subr.bf16.mxu0 %v686
        %857 = vmatpush1.bf16.msra.mxu0 %v685
        %858 = vmatprep.subr.bf16.mxu0 %v690
        %859 = vmatpush1.bf16.msra.mxu0 %v689
        %860 = vmatprep.mubr.bf16.mxu0 %v342
        %861 = vmatmul.mubr.bf16.gmra.mrb[0].mxu0 %v341
        %v862 = vpop.f32.mrb[0].mxu0
        %v863 = vadd.f32 %v426, %v862
        %v864 = vpop.f32.mrb[0].mxu0
        %v865 = vadd.f32 %v430, %v864
        %v866 = vpop.f32.mrb[0].mxu0
        %v867 = vadd.f32 %v426, %v866
        %v868 = vpop.f32.mrb[0].mxu0
        %v869 = vadd.f32 %v430, %v868
        %870 = vmatprep.mubr.bf16.mxu0 %v344
        %871 = vmatmul.mubr.bf16.gmra.mrb[0].mxu0 %v343
        %v872 = vpop.f32.mrb[0].mxu0
        %v873 = vadd.f32 %v426, %v872
        %v874 = vpop.f32.mrb[0].mxu0
        %v875 = vadd.f32 %v430, %v874
        %v876 = vpop.f32.mrb[0].mxu0
        %v877 = vadd.f32 %v426, %v876
        %v878 = vpop.f32.mrb[0].mxu0
        %v879 = vadd.f32 %v430, %v878
        %880 = vmatprep.mubr.bf16.mxu0 %v346
        %881 = vmatmul.mubr.bf16.gmra.mrb[0].mxu0 %v345
        %v882 = vpop.f32.mrb[0].mxu0
        %v883 = vadd.f32 %v426, %v882
        %v884 = vpop.f32.mrb[0].mxu0
        %v885 = vadd.f32 %v430, %v884
        %v886 = vpop.f32.mrb[0].mxu0
        %v887 = vadd.f32 %v426, %v886
        %v888 = vpop.f32.mrb[0].mxu0
        %v889 = vadd.f32 %v430, %v888
        %890 = vmatprep.mubr.bf16.mxu0 %v348
        %891 = vmatmul.mubr.bf16.gmra.mrb[0].mxu0 %v347
        %v892 = vpop.f32.mrb[0].mxu0
        %v893 = vadd.f32 %v426, %v892
        %v894 = vpop.f32.mrb[0].mxu0
        %v895 = vadd.f32 %v430, %v894
        %v896 = vpop.f32.mrb[0].mxu0
        %v897 = vadd.f32 %v426, %v896
        %v898 = vpop.f32.mrb[0].mxu0
        %v899 = vadd.f32 %v430, %v898
        %900 = vdwg.mxu0
        %v901 = vmax.f32 %v790, 0.0
        %v902 = vmax.f32 %v792, 0.0
        %v903 = vmax.f32 %v863, 0.0
        %v904 = vmax.f32 %v865, 0.0
        %v905 = vmax.f32 %v794, 0.0
        %v906 = vmax.f32 %v796, 0.0
        %v907 = vmax.f32 %v867, 0.0
        %v908 = vmax.f32 %v869, 0.0
        %v909 = vmax.f32 %v800, 0.0
        %v910 = vmax.f32 %v802, 0.0
        %v911 = vmax.f32 %v873, 0.0
        %v912 = vmax.f32 %v875, 0.0
        %v913 = vmax.f32 %v804, 0.0
        %v914 = vmax.f32 %v806, 0.0
        %v915 = vmax.f32 %v877, 0.0
        %v916 = vmax.f32 %v879, 0.0
        %v917 = vmax.f32 %v810, 0.0
        %v918 = vmax.f32 %v812, 0.0
        %v919 = vmax.f32 %v883, 0.0
        %v920 = vmax.f32 %v885, 0.0
        %v921 = vmax.f32 %v814, 0.0
        %v922 = vmax.f32 %v816, 0.0
        %v923 = vmax.f32 %v887, 0.0
        %v924 = vmax.f32 %v889, 0.0
        %v925 = vmax.f32 %v820, 0.0
        %v926 = vmax.f32 %v822, 0.0
        %v927 = vmax.f32 %v893, 0.0
        %v928 = vmax.f32 %v895, 0.0
        %v929 = vmax.f32 %v824, 0.0
        %v930 = vmax.f32 %v826, 0.0
        %v931 = vmax.f32 %v897, 0.0
        %v932 = vmax.f32 %v899, 0.0
        %v933 = vpack.c.bf16 %v905, %v901
        %v934 = vpack.c.bf16 %v906, %v902
        %v935 = vpack.c.bf16 %v907, %v903
        %v936 = vpack.c.bf16 %v908, %v904
        %v937 = vpack.c.bf16 %v913, %v909
        %v938 = vpack.c.bf16 %v914, %v910
        %v939 = vpack.c.bf16 %v915, %v911
        %v940 = vpack.c.bf16 %v916, %v912
        %v941 = vpack.c.bf16 %v921, %v917
        %v942 = vpack.c.bf16 %v922, %v918
        %v943 = vpack.c.bf16 %v923, %v919
        %v944 = vpack.c.bf16 %v924, %v920
        %v945 = vpack.c.bf16 %v929, %v925
        %v946 = vpack.c.bf16 %v930, %v926
        %v947 = vpack.c.bf16 %v931, %v927
        %v948 = vpack.c.bf16 %v932, %v928
        %v949 = vld [vmem:[%s4] sm:$0xff]
        %v950 = vld [vmem:[%s4 + $0x8] sm:$0xff]
        %v951 = vld [vmem:[%s4 + $0x10] sm:$0xff]
        %v952 = vld [vmem:[%s4 + $0x18] sm:$0xff]
        %v953 = vld [vmem:[%s4 + $0x20] sm:$0xff]
        %v954 = vld [vmem:[%s4 + $0x28] sm:$0xff]
        %v955 = vld [vmem:[%s4 + $0x30] sm:$0xff]
        %v956 = vld [vmem:[%s4 + $0x38] sm:$0xff]
        %v957 = vld [vmem:[%s4 + $0x40] sm:$0xff]
        %v958 = vld [vmem:[%s4 + $0x48] sm:$0xff]
        %v959 = vld [vmem:[%s4 + $0x50] sm:$0xff]
        %v960 = vld [vmem:[%s4 + $0x58] sm:$0xff]
        %v961 = vld [vmem:[%s4 + $0x60] sm:$0xff]
        %v962 = vld [vmem:[%s4 + $0x68] sm:$0xff]
        %v963 = vld [vmem:[%s4 + $0x70] sm:$0xff]
        %v964 = vld [vmem:[%s4 + $0x78] sm:$0xff]
        %v965 = vld [vmem:[%s4 + $0x80] sm:$0xff]
        %v966 = vld [vmem:[%s4 + $0x88] sm:$0xff]
        %v967 = vld [vmem:[%s4 + $0x90] sm:$0xff]
        %v968 = vld [vmem:[%s4 + $0x98] sm:$0xff]
        %v969 = vld [vmem:[%s4 + $0xa0] sm:$0xff]
        %v970 = vld [vmem:[%s4 + $0xa8] sm:$0xff]
        %v971 = vld [vmem:[%s4 + $0xb0] sm:$0xff]
        %v972 = vld [vmem:[%s4 + $0xb8] sm:$0xff]
        %v973 = vld [vmem:[%s4 + $0xc0] sm:$0xff]
        %v974 = vld [vmem:[%s4 + $0xc8] sm:$0xff]
        %v975 = vld [vmem:[%s4 + $0xd0] sm:$0xff]
        %v976 = vld [vmem:[%s4 + $0xd8] sm:$0xff]
        %v977 = vld [vmem:[%s4 + $0xe0] sm:$0xff]
        %v978 = vld [vmem:[%s4 + $0xe8] sm:$0xff]
        %v979 = vld [vmem:[%s4 + $0xf0] sm:$0xff]
        %v980 = vld [vmem:[%s4 + $0xf8] sm:$0xff]
        %v981 = vld [vmem:[%s4 + $0x100] sm:$0xff]
        %v982 = vld [vmem:[%s4 + $0x108] sm:$0xff]
        %v983 = vld [vmem:[%s4 + $0x110] sm:$0xff]
        %v984 = vld [vmem:[%s4 + $0x118] sm:$0xff]
        %v985 = vld [vmem:[%s4 + $0x120] sm:$0xff]
        %v986 = vld [vmem:[%s4 + $0x128] sm:$0xff]
        %v987 = vld [vmem:[%s4 + $0x130] sm:$0xff]
        %v988 = vld [vmem:[%s4 + $0x138] sm:$0xff]
        %v989 = vld [vmem:[%s4 + $0x140] sm:$0xff]
        %v990 = vld [vmem:[%s4 + $0x148] sm:$0xff]
        %v991 = vld [vmem:[%s4 + $0x150] sm:$0xff]
        %v992 = vld [vmem:[%s4 + $0x158] sm:$0xff]
        %v993 = vld [vmem:[%s4 + $0x160] sm:$0xff]
        %v994 = vld [vmem:[%s4 + $0x168] sm:$0xff]
        %v995 = vld [vmem:[%s4 + $0x170] sm:$0xff]
        %v996 = vld [vmem:[%s4 + $0x178] sm:$0xff]
        %v997 = vld [vmem:[%s4 + $0x180] sm:$0xff]
        %v998 = vld [vmem:[%s4 + $0x188] sm:$0xff]
        %v999 = vld [vmem:[%s4 + $0x190] sm:$0xff]
        %v1000 = vld [vmem:[%s4 + $0x198] sm:$0xff]
        %v1001 = vld [vmem:[%s4 + $0x1a0] sm:$0xff]
        %v1002 = vld [vmem:[%s4 + $0x1a8] sm:$0xff]
        %v1003 = vld [vmem:[%s4 + $0x1b0] sm:$0xff]
        %v1004 = vld [vmem:[%s4 + $0x1b8] sm:$0xff]
        %v1005 = vld [vmem:[%s4 + $0x1c0] sm:$0xff]
        %v1006 = vld [vmem:[%s4 + $0x1c8] sm:$0xff]
        %v1007 = vld [vmem:[%s4 + $0x1d0] sm:$0xff]
        %v1008 = vld [vmem:[%s4 + $0x1d8] sm:$0xff]
        %v1009 = vld [vmem:[%s4 + $0x1e0] sm:$0xff]
        %v1010 = vld [vmem:[%s4 + $0x1e8] sm:$0xff]
        %v1011 = vld [vmem:[%s4 + $0x1f0] sm:$0xff]
        %v1012 = vld [vmem:[%s4 + $0x1f8] sm:$0xff]
        %v1013 = vld [vmem:[%s5] sm:$0x3]
        %v1015 = vlaneseq
        %v1016 = vshrl.u32 %v1015, 7
        %v1017 = vsub.s32 0, %v1016
        %v1018 = vrot.slane %v1013, %v1017
        %v1019 = vlaneseq
        %v1020 = vshrl.u32 %v1019, 7
        %v1021 = vsub.s32 1, %v1020
        %v1022 = vrot.slane %v1013, %v1021
        %v1089 = vunpack.c.l.b16 %v949
        %v1090 = vunpack.c.h.b16 %v949
        %v1091 = vunpack.c.l.b16 %v950
        %v1092 = vunpack.c.h.b16 %v950
        %v1093 = vunpack.c.l.b16 %v951
        %v1094 = vunpack.c.h.b16 %v951
        %v1095 = vunpack.c.l.b16 %v952
        %v1096 = vunpack.c.h.b16 %v952
        %v1097 = vunpack.c.l.b16 %v953
        %v1098 = vunpack.c.h.b16 %v953
        %v1099 = vunpack.c.l.b16 %v954
        %v1100 = vunpack.c.h.b16 %v954
        %v1101 = vunpack.c.l.b16 %v955
        %v1102 = vunpack.c.h.b16 %v955
        %v1103 = vunpack.c.l.b16 %v956
        %v1104 = vunpack.c.h.b16 %v956
        %v1105 = vunpack.c.l.b16 %v957
        %v1106 = vunpack.c.h.b16 %v957
        %v1107 = vunpack.c.l.b16 %v958
        %v1108 = vunpack.c.h.b16 %v958
        %v1109 = vunpack.c.l.b16 %v959
        %v1110 = vunpack.c.h.b16 %v959
        %v1111 = vunpack.c.l.b16 %v960
        %v1112 = vunpack.c.h.b16 %v960
        %v1113 = vunpack.c.l.b16 %v961
        %v1114 = vunpack.c.h.b16 %v961
        %v1115 = vunpack.c.l.b16 %v962
        %v1116 = vunpack.c.h.b16 %v962
        %v1117 = vunpack.c.l.b16 %v963
        %v1118 = vunpack.c.h.b16 %v963
        %v1119 = vunpack.c.l.b16 %v964
        %v1120 = vunpack.c.h.b16 %v964
        %v1121 = vunpack.c.l.b16 %v965
        %v1122 = vunpack.c.h.b16 %v965
        %v1123 = vunpack.c.l.b16 %v966
        %v1124 = vunpack.c.h.b16 %v966
        %v1125 = vunpack.c.l.b16 %v967
        %v1126 = vunpack.c.h.b16 %v967
        %v1127 = vunpack.c.l.b16 %v968
        %v1128 = vunpack.c.h.b16 %v968
        %v1129 = vunpack.c.l.b16 %v969
        %v1130 = vunpack.c.h.b16 %v969
        %v1131 = vunpack.c.l.b16 %v970
        %v1132 = vunpack.c.h.b16 %v970
        %v1133 = vunpack.c.l.b16 %v971
        %v1134 = vunpack.c.h.b16 %v971
        %v1135 = vunpack.c.l.b16 %v972
        %v1136 = vunpack.c.h.b16 %v972
        %v1137 = vunpack.c.l.b16 %v973
        %v1138 = vunpack.c.h.b16 %v973
        %v1139 = vunpack.c.l.b16 %v974
        %v1140 = vunpack.c.h.b16 %v974
        %v1141 = vunpack.c.l.b16 %v975
        %v1142 = vunpack.c.h.b16 %v975
        %v1143 = vunpack.c.l.b16 %v976
        %v1144 = vunpack.c.h.b16 %v976
        %v1145 = vunpack.c.l.b16 %v977
        %v1146 = vunpack.c.h.b16 %v977
        %v1147 = vunpack.c.l.b16 %v978
        %v1148 = vunpack.c.h.b16 %v978
        %v1149 = vunpack.c.l.b16 %v979
        %v1150 = vunpack.c.h.b16 %v979
        %v1151 = vunpack.c.l.b16 %v980
        %v1152 = vunpack.c.h.b16 %v980
        %v1153 = vunpack.c.l.b16 %v981
        %v1154 = vunpack.c.h.b16 %v981
        %v1155 = vunpack.c.l.b16 %v982
        %v1156 = vunpack.c.h.b16 %v982
        %v1157 = vunpack.c.l.b16 %v983
        %v1158 = vunpack.c.h.b16 %v983
        %v1159 = vunpack.c.l.b16 %v984
        %v1160 = vunpack.c.h.b16 %v984
        %v1161 = vunpack.c.l.b16 %v985
        %v1162 = vunpack.c.h.b16 %v985
        %v1163 = vunpack.c.l.b16 %v986
        %v1164 = vunpack.c.h.b16 %v986
        %v1165 = vunpack.c.l.b16 %v987
        %v1166 = vunpack.c.h.b16 %v987
        %v1167 = vunpack.c.l.b16 %v988
        %v1168 = vunpack.c.h.b16 %v988
        %v1169 = vunpack.c.l.b16 %v989
        %v1170 = vunpack.c.h.b16 %v989
        %v1171 = vunpack.c.l.b16 %v990
        %v1172 = vunpack.c.h.b16 %v990
        %v1173 = vunpack.c.l.b16 %v991
        %v1174 = vunpack.c.h.b16 %v991
        %v1175 = vunpack.c.l.b16 %v992
        %v1176 = vunpack.c.h.b16 %v992
        %v1177 = vunpack.c.l.b16 %v993
        %v1178 = vunpack.c.h.b16 %v993
        %v1179 = vunpack.c.l.b16 %v994
        %v1180 = vunpack.c.h.b16 %v994
        %v1181 = vunpack.c.l.b16 %v995
        %v1182 = vunpack.c.h.b16 %v995
        %v1183 = vunpack.c.l.b16 %v996
        %v1184 = vunpack.c.h.b16 %v996
        %v1185 = vunpack.c.l.b16 %v997
        %v1186 = vunpack.c.h.b16 %v997
        %v1187 = vunpack.c.l.b16 %v998
        %v1188 = vunpack.c.h.b16 %v998
        %v1189 = vunpack.c.l.b16 %v999
        %v1190 = vunpack.c.h.b16 %v999
        %v1191 = vunpack.c.l.b16 %v1000
        %v1192 = vunpack.c.h.b16 %v1000
        %v1193 = vunpack.c.l.b16 %v1001
        %v1194 = vunpack.c.h.b16 %v1001
        %v1195 = vunpack.c.l.b16 %v1002
        %v1196 = vunpack.c.h.b16 %v1002
        %v1197 = vunpack.c.l.b16 %v1003
        %v1198 = vunpack.c.h.b16 %v1003
        %v1199 = vunpack.c.l.b16 %v1004
        %v1200 = vunpack.c.h.b16 %v1004
        %v1201 = vunpack.c.l.b16 %v1005
        %v1202 = vunpack.c.h.b16 %v1005
        %v1203 = vunpack.c.l.b16 %v1006
        %v1204 = vunpack.c.h.b16 %v1006
        %v1205 = vunpack.c.l.b16 %v1007
        %v1206 = vunpack.c.h.b16 %v1007
        %v1207 = vunpack.c.l.b16 %v1008
        %v1208 = vunpack.c.h.b16 %v1008
        %v1209 = vunpack.c.l.b16 %v1009
        %v1210 = vunpack.c.h.b16 %v1009
        %v1211 = vunpack.c.l.b16 %v1010
        %v1212 = vunpack.c.h.b16 %v1010
        %v1213 = vunpack.c.l.b16 %v1011
        %v1214 = vunpack.c.h.b16 %v1011
        %v1215 = vunpack.c.l.b16 %v1012
        %v1216 = vunpack.c.h.b16 %v1012
        %v1217 = vpack.c.b16 %v1091, %v1089
        %v1218 = vpack.c.b16 %v1092, %v1090
        %v1219 = vpack.c.b16 %v1095, %v1093
        %v1220 = vpack.c.b16 %v1096, %v1094
        %v1221 = vpack.c.b16 %v1099, %v1097
        %v1222 = vpack.c.b16 %v1100, %v1098
        %v1223 = vpack.c.b16 %v1103, %v1101
        %v1224 = vpack.c.b16 %v1104, %v1102
        %v1225 = vpack.c.b16 %v1107, %v1105
        %v1226 = vpack.c.b16 %v1108, %v1106
        %v1227 = vpack.c.b16 %v1111, %v1109
        %v1228 = vpack.c.b16 %v1112, %v1110
        %v1229 = vpack.c.b16 %v1115, %v1113
        %v1230 = vpack.c.b16 %v1116, %v1114
        %v1231 = vpack.c.b16 %v1119, %v1117
        %v1232 = vpack.c.b16 %v1120, %v1118
        %v1233 = vpack.c.b16 %v1123, %v1121
        %v1234 = vpack.c.b16 %v1124, %v1122
        %v1235 = vpack.c.b16 %v1127, %v1125
        %v1236 = vpack.c.b16 %v1128, %v1126
        %v1237 = vpack.c.b16 %v1131, %v1129
        %v1238 = vpack.c.b16 %v1132, %v1130
        %v1239 = vpack.c.b16 %v1135, %v1133
        %v1240 = vpack.c.b16 %v1136, %v1134
        %v1241 = vpack.c.b16 %v1139, %v1137
        %v1242 = vpack.c.b16 %v1140, %v1138
        %v1243 = vpack.c.b16 %v1143, %v1141
        %v1244 = vpack.c.b16 %v1144, %v1142
        %v1245 = vpack.c.b16 %v1147, %v1145
        %v1246 = vpack.c.b16 %v1148, %v1146
        %v1247 = vpack.c.b16 %v1151, %v1149
        %v1248 = vpack.c.b16 %v1152, %v1150
        %v1249 = vpack.c.b16 %v1155, %v1153
        %v1250 = vpack.c.b16 %v1156, %v1154
        %v1251 = vpack.c.b16 %v1159, %v1157
        %v1252 = vpack.c.b16 %v1160, %v1158
        %v1253 = vpack.c.b16 %v1163, %v1161
        %v1254 = vpack.c.b16 %v1164, %v1162
        %v1255 = vpack.c.b16 %v1167, %v1165
        %v1256 = vpack.c.b16 %v1168, %v1166
        %v1257 = vpack.c.b16 %v1171, %v1169
        %v1258 = vpack.c.b16 %v1172, %v1170
        %v1259 = vpack.c.b16 %v1175, %v1173
        %v1260 = vpack.c.b16 %v1176, %v1174
        %v1261 = vpack.c.b16 %v1179, %v1177
        %v1262 = vpack.c.b16 %v1180, %v1178
        %v1263 = vpack.c.b16 %v1183, %v1181
        %v1264 = vpack.c.b16 %v1184, %v1182
        %v1265 = vpack.c.b16 %v1187, %v1185
        %v1266 = vpack.c.b16 %v1188, %v1186
        %v1267 = vpack.c.b16 %v1191, %v1189
        %v1268 = vpack.c.b16 %v1192, %v1190
        %v1269 = vpack.c.b16 %v1195, %v1193
        %v1270 = vpack.c.b16 %v1196, %v1194
        %v1271 = vpack.c.b16 %v1199, %v1197
        %v1272 = vpack.c.b16 %v1200, %v1198
        %v1273 = vpack.c.b16 %v1203, %v1201
        %v1274 = vpack.c.b16 %v1204, %v1202
        %v1275 = vpack.c.b16 %v1207, %v1205
        %v1276 = vpack.c.b16 %v1208, %v1206
        %v1277 = vpack.c.b16 %v1211, %v1209
        %v1278 = vpack.c.b16 %v1212, %v1210
        %v1279 = vpack.c.b16 %v1215, %v1213
        %v1280 = vpack.c.b16 %v1216, %v1214
        %1345 = vmatprep.subr.bf16.mxu0 %v1218
        %1346 = vmatpush1.bf16.msra.mxu0 %v1217
        %1347 = vmatprep.subr.bf16.mxu0 %v1220
        %1348 = vmatpush1.bf16.msra.mxu0 %v1219
        %1349 = vmatprep.subr.bf16.mxu0 %v1222
        %1350 = vmatpush1.bf16.msra.mxu0 %v1221
        %1351 = vmatprep.subr.bf16.mxu0 %v1224
        %1352 = vmatpush1.bf16.msra.mxu0 %v1223
        %1353 = vmatprep.subr.bf16.mxu0 %v1226
        %1354 = vmatpush1.bf16.msra.mxu0 %v1225
        %1355 = vmatprep.subr.bf16.mxu0 %v1228
        %1356 = vmatpush1.bf16.msra.mxu0 %v1227
        %1357 = vmatprep.subr.bf16.mxu0 %v1230
        %1358 = vmatpush1.bf16.msra.mxu0 %v1229
        %1359 = vmatprep.subr.bf16.mxu0 %v1232
        %1360 = vmatpush1.bf16.msra.mxu0 %v1231
        %1361 = vmatprep.subr.bf16.mxu0 %v1234
        %1362 = vmatpush1.bf16.msra.mxu0 %v1233
        %1363 = vmatprep.subr.bf16.mxu0 %v1236
        %1364 = vmatpush1.bf16.msra.mxu0 %v1235
        %1365 = vmatprep.subr.bf16.mxu0 %v1238
        %1366 = vmatpush1.bf16.msra.mxu0 %v1237
        %1367 = vmatprep.subr.bf16.mxu0 %v1240
        %1368 = vmatpush1.bf16.msra.mxu0 %v1239
        %1369 = vmatprep.subr.bf16.mxu0 %v1242
        %1370 = vmatpush1.bf16.msra.mxu0 %v1241
        %1371 = vmatprep.subr.bf16.mxu0 %v1244
        %1372 = vmatpush1.bf16.msra.mxu0 %v1243
        %1373 = vmatprep.subr.bf16.mxu0 %v1246
        %1374 = vmatpush1.bf16.msra.mxu0 %v1245
        %1375 = vmatprep.subr.bf16.mxu0 %v1248
        %1376 = vmatpush1.bf16.msra.mxu0 %v1247
        %1377 = vmatprep.mubr.bf16.mxu0 %v934
        %1378 = vmatmul.mubr.bf16.gmra.mrb[0].mxu0 %v933
        %v1379 = vpop.f32.mrb[0].mxu0
        %v1380 = vadd.f32 %v1018, %v1379
        %v1381 = vpop.f32.mrb[0].mxu0
        %v1382 = vadd.f32 %v1022, %v1381
        %v1383 = vpop.f32.mrb[0].mxu0
        %v1384 = vadd.f32 %v1018, %v1383
        %v1385 = vpop.f32.mrb[0].mxu0
        %v1386 = vadd.f32 %v1022, %v1385
        %1387 = vmatprep.mubr.bf16.mxu0 %v938
        %1388 = vmatmul.mubr.bf16.gmra.mrb[0].mxu0 %v937
        %v1389 = vpop.f32.mrb[0].mxu0
        %v1390 = vadd.f32 %v1018, %v1389
        %v1391 = vpop.f32.mrb[0].mxu0
        %v1392 = vadd.f32 %v1022, %v1391
        %v1393 = vpop.f32.mrb[0].mxu0
        %v1394 = vadd.f32 %v1018, %v1393
        %v1395 = vpop.f32.mrb[0].mxu0
        %v1396 = vadd.f32 %v1022, %v1395
        %1397 = vmatprep.mubr.bf16.mxu0 %v942
        %1398 = vmatmul.mubr.bf16.gmra.mrb[0].mxu0 %v941
        %v1399 = vpop.f32.mrb[0].mxu0
        %v1400 = vadd.f32 %v1018, %v1399
        %v1401 = vpop.f32.mrb[0].mxu0
        %v1402 = vadd.f32 %v1022, %v1401
        %v1403 = vpop.f32.mrb[0].mxu0
        %v1404 = vadd.f32 %v1018, %v1403
        %v1405 = vpop.f32.mrb[0].mxu0
        %v1406 = vadd.f32 %v1022, %v1405
        %1407 = vmatprep.mubr.bf16.mxu0 %v946
        %1408 = vmatmul.mubr.bf16.gmra.mrb[0].mxu0 %v945
        %v1409 = vpop.f32.mrb[0].mxu0
        %v1410 = vadd.f32 %v1018, %v1409
        %v1411 = vpop.f32.mrb[0].mxu0
        %v1412 = vadd.f32 %v1022, %v1411
        %v1413 = vpop.f32.mrb[0].mxu0
        %v1414 = vadd.f32 %v1018, %v1413
        %v1415 = vpop.f32.mrb[0].mxu0
        %v1416 = vadd.f32 %v1022, %v1415
        %1417 = vdwg.mxu0
        %1418 = vmatprep.subr.bf16.mxu0 %v1250
        %1419 = vmatpush1.bf16.msra.mxu0 %v1249
        %1420 = vmatprep.subr.bf16.mxu0 %v1252
        %1421 = vmatpush1.bf16.msra.mxu0 %v1251
        %1422 = vmatprep.subr.bf16.mxu0 %v1254
        %1423 = vmatpush1.bf16.msra.mxu0 %v1253
        %1424 = vmatprep.subr.bf16.mxu0 %v1256
        %1425 = vmatpush1.bf16.msra.mxu0 %v1255
        %1426 = vmatprep.subr.bf16.mxu0 %v1258
        %1427 = vmatpush1.bf16.msra.mxu0 %v1257
        %1428 = vmatprep.subr.bf16.mxu0 %v1260
        %1429 = vmatpush1.bf16.msra.mxu0 %v1259
        %1430 = vmatprep.subr.bf16.mxu0 %v1262
        %1431 = vmatpush1.bf16.msra.mxu0 %v1261
        %1432 = vmatprep.subr.bf16.mxu0 %v1264
        %1433 = vmatpush1.bf16.msra.mxu0 %v1263
        %1434 = vmatprep.subr.bf16.mxu0 %v1266
        %1435 = vmatpush1.bf16.msra.mxu0 %v1265
        %1436 = vmatprep.subr.bf16.mxu0 %v1268
        %1437 = vmatpush1.bf16.msra.mxu0 %v1267
        %1438 = vmatprep.subr.bf16.mxu0 %v1270
        %1439 = vmatpush1.bf16.msra.mxu0 %v1269
        %1440 = vmatprep.subr.bf16.mxu0 %v1272
        %1441 = vmatpush1.bf16.msra.mxu0 %v1271
        %1442 = vmatprep.subr.bf16.mxu0 %v1274
        %1443 = vmatpush1.bf16.msra.mxu0 %v1273
        %1444 = vmatprep.subr.bf16.mxu0 %v1276
        %1445 = vmatpush1.bf16.msra.mxu0 %v1275
        %1446 = vmatprep.subr.bf16.mxu0 %v1278
        %1447 = vmatpush1.bf16.msra.mxu0 %v1277
        %1448 = vmatprep.subr.bf16.mxu0 %v1280
        %1449 = vmatpush1.bf16.msra.mxu0 %v1279
        %1450 = vmatprep.mubr.bf16.mxu0 %v936
        %1451 = vmatmul.mubr.bf16.gmra.mrb[0].mxu0 %v935
        %v1452 = vpop.f32.mrb[0].mxu0
        %v1453 = vadd.f32 %v1380, %v1452
        %v1454 = vpop.f32.mrb[0].mxu0
        %v1455 = vadd.f32 %v1382, %v1454
        %v1456 = vpop.f32.mrb[0].mxu0
        %v1457 = vadd.f32 %v1384, %v1456
        %v1458 = vpop.f32.mrb[0].mxu0
        %v1459 = vadd.f32 %v1386, %v1458
        %1460 = vmatprep.mubr.bf16.mxu0 %v940
        %1461 = vmatmul.mubr.bf16.gmra.mrb[0].mxu0 %v939
        %v1462 = vpop.f32.mrb[0].mxu0
        %v1463 = vadd.f32 %v1390, %v1462
        %v1464 = vpop.f32.mrb[0].mxu0
        %v1465 = vadd.f32 %v1392, %v1464
        %v1466 = vpop.f32.mrb[0].mxu0
        %v1467 = vadd.f32 %v1394, %v1466
        %v1468 = vpop.f32.mrb[0].mxu0
        %v1469 = vadd.f32 %v1396, %v1468
        %1470 = vmatprep.mubr.bf16.mxu0 %v944
        %1471 = vmatmul.mubr.bf16.gmra.mrb[0].mxu0 %v943
        %v1472 = vpop.f32.mrb[0].mxu0
        %v1473 = vadd.f32 %v1400, %v1472
        %v1474 = vpop.f32.mrb[0].mxu0
        %v1475 = vadd.f32 %v1402, %v1474
        %v1476 = vpop.f32.mrb[0].mxu0
        %v1477 = vadd.f32 %v1404, %v1476
        %v1478 = vpop.f32.mrb[0].mxu0
        %v1479 = vadd.f32 %v1406, %v1478
        %1480 = vmatprep.mubr.bf16.mxu0 %v948
        %1481 = vmatmul.mubr.bf16.gmra.mrb[0].mxu0 %v947
        %v1482 = vpop.f32.mrb[0].mxu0
        %v1483 = vadd.f32 %v1410, %v1482
        %v1484 = vpop.f32.mrb[0].mxu0
        %v1485 = vadd.f32 %v1412, %v1484
        %v1486 = vpop.f32.mrb[0].mxu0
        %v1487 = vadd.f32 %v1414, %v1486
        %v1488 = vpop.f32.mrb[0].mxu0
        %v1489 = vadd.f32 %v1416, %v1488
        %1490 = vdwg.mxu0
        %v1491 = vld [vmem:[%s312] sm:$0x3]
        %v1492 = vld [vmem:[%s312 + $0x2] sm:$0x3]
        %v1493 = vld [vmem:[%s312 + $0x4] sm:$0x3]
        %v1494 = vld [vmem:[%s312 + $0x6] sm:$0x3]
        %v1495 = vld [vmem:[%s312 + $0x8] sm:$0x3]
        %v1496 = vld [vmem:[%s312 + $0xa] sm:$0x3]
        %v1497 = vld [vmem:[%s312 + $0xc] sm:$0x3]
        %v1498 = vld [vmem:[%s312 + $0xe] sm:$0x3]
        %vm1499 = vnez %v1491
        %vm1500 = vnez %v1492
        %vm1501 = vnez %v1493
        %vm1502 = vnez %v1494
        %vm1503 = vnez %v1495
        %vm1504 = vnez %v1496
        %vm1505 = vnez %v1497
        %vm1506 = vnez %v1498
        %v1507 = vsel %vm1499, 16843009, 0
        %v1508 = vsel %vm1500, 16843009, 0
        %v1509 = vsel %vm1501, 16843009, 0
        %v1510 = vsel %vm1502, 16843009, 0
        %v1511 = vsel %vm1503, 16843009, 0
        %v1512 = vsel %vm1504, 16843009, 0
        %v1513 = vsel %vm1505, 16843009, 0
        %v1514 = vsel %vm1506, 16843009, 0
        %v1515 = vunpack.c.0.s8 %v1507
        %v1516 = vunpack.c.0.s8 %v1508
        %v1517 = vunpack.c.0.s8 %v1509
        %v1518 = vunpack.c.0.s8 %v1510
        %v1519 = vunpack.c.0.s8 %v1511
        %v1520 = vunpack.c.0.s8 %v1512
        %v1521 = vunpack.c.0.s8 %v1513
        %v1522 = vunpack.c.0.s8 %v1514
        %vm1523 = vcmp.ne.s32.totalorder %v1515, 0
        %vm1524 = vcmp.ne.s32.totalorder %v1516, 0
        %vm1525 = vcmp.ne.s32.totalorder %v1517, 0
        %vm1526 = vcmp.ne.s32.totalorder %v1518, 0
        %vm1527 = vcmp.ne.s32.totalorder %v1519, 0
        %vm1528 = vcmp.ne.s32.totalorder %v1520, 0
        %vm1529 = vcmp.ne.s32.totalorder %v1521, 0
        %vm1530 = vcmp.ne.s32.totalorder %v1522, 0
        %v1531 = vsel %vm1523, -1e+09, %v1455
        %v1532 = vsel %vm1524, -1e+09, %v1459
        %v1533 = vsel %vm1525, -1e+09, %v1465
        %v1534 = vsel %vm1526, -1e+09, %v1469
        %v1535 = vsel %vm1527, -1e+09, %v1475
        %v1536 = vsel %vm1528, -1e+09, %v1479
        %v1537 = vsel %vm1529, -1e+09, %v1485
        %v1538 = vsel %vm1530, -1e+09, %v1489
        %vm1539 = vcmask 64512
        %v1540 = vsel %vm1539, %v1531, -inf
        %1541 = vmax.xlane.f32.xlu0 %v1540
        %v1542 = vpop.xlane.xlu0 %1541
        %v1543 = vsel %vm1539, %v1532, -inf
        %1544 = vmax.xlane.f32.xlu0 %v1543
        %v1545 = vpop.xlane.xlu0 %1544
        %v1546 = vsel %vm1539, %v1533, -inf
        %1547 = vmax.xlane.f32.xlu0 %v1546
        %v1548 = vpop.xlane.xlu0 %1547
        %v1549 = vsel %vm1539, %v1534, -inf
        %1550 = vmax.xlane.f32.xlu0 %v1549
        %v1551 = vpop.xlane.xlu0 %1550
        %v1552 = vsel %vm1539, %v1535, -inf
        %1553 = vmax.xlane.f32.xlu0 %v1552
        %v1554 = vpop.xlane.xlu0 %1553
        %v1555 = vsel %vm1539, %v1536, -inf
        %1556 = vmax.xlane.f32.xlu0 %v1555
        %v1557 = vpop.xlane.xlu0 %1556
        %v1558 = vsel %vm1539, %v1537, -inf
        %1559 = vmax.xlane.f32.xlu0 %v1558
        %v1560 = vpop.xlane.xlu0 %1559
        %v1561 = vsel %vm1539, %v1538, -inf
        %1562 = vmax.xlane.f32.xlu0 %v1561
        %v1563 = vpop.xlane.xlu0 %1562
        %v1564 = vsub.f32 %v1531, %v1542
        %v1565 = vsub.f32 %v1532, %v1545
        %v1566 = vsub.f32 %v1533, %v1548
        %v1567 = vsub.f32 %v1534, %v1551
        %v1568 = vsub.f32 %v1535, %v1554
        %v1569 = vsub.f32 %v1536, %v1557
        %v1570 = vsub.f32 %v1537, %v1560
        %v1571 = vsub.f32 %v1538, %v1563
        %v1572 = vmul.f32 %v1564, 1.442695
        %v1573 = vpow.pop %v1572
        %v1574 = vmul.f32 %v1565, 1.442695
        %v1575 = vpow.pop %v1574
        %v1576 = vmul.f32 %v1566, 1.442695
        %v1577 = vpow.pop %v1576
        %v1578 = vmul.f32 %v1567, 1.442695
        %v1579 = vpow.pop %v1578
        %v1580 = vmul.f32 %v1568, 1.442695
        %v1581 = vpow.pop %v1580
        %v1582 = vmul.f32 %v1569, 1.442695
        %v1583 = vpow.pop %v1582
        %v1584 = vmul.f32 %v1570, 1.442695
        %v1585 = vpow.pop %v1584
        %v1586 = vmul.f32 %v1571, 1.442695
        %v1587 = vpow.pop %v1586
        %v1588 = vsel %vm1539, %v1573, 0.0
        %1589 = vadd.xlane.f32.xlu0 %v1588
        %v1590 = vpop.xlane.xlu0 %1589
        %v1591 = vsel %vm1539, %v1575, 0.0
        %1592 = vadd.xlane.f32.xlu0 %v1591
        %v1593 = vpop.xlane.xlu0 %1592
        %v1594 = vsel %vm1539, %v1577, 0.0
        %1595 = vadd.xlane.f32.xlu0 %v1594
        %v1596 = vpop.xlane.xlu0 %1595
        %v1597 = vsel %vm1539, %v1579, 0.0
        %1598 = vadd.xlane.f32.xlu0 %v1597
        %v1599 = vpop.xlane.xlu0 %1598
        %v1600 = vsel %vm1539, %v1581, 0.0
        %1601 = vadd.xlane.f32.xlu0 %v1600
        %v1602 = vpop.xlane.xlu0 %1601
        %v1603 = vsel %vm1539, %v1583, 0.0
        %1604 = vadd.xlane.f32.xlu0 %v1603
        %v1605 = vpop.xlane.xlu0 %1604
        %v1606 = vsel %vm1539, %v1585, 0.0
        %1607 = vadd.xlane.f32.xlu0 %v1606
        %v1608 = vpop.xlane.xlu0 %1607
        %v1609 = vsel %vm1539, %v1587, 0.0
        %1610 = vadd.xlane.f32.xlu0 %v1609
        %v1611 = vpop.xlane.xlu0 %1610
        %v1612 = vrcp.pop %v1590
        %v1613 = vmul.f32 %v1573, %v1612
        %v1614 = vrcp.pop %v1593
        %v1615 = vmul.f32 %v1575, %v1614
        %v1616 = vrcp.pop %v1596
        %v1617 = vmul.f32 %v1577, %v1616
        %v1618 = vrcp.pop %v1599
        %v1619 = vmul.f32 %v1579, %v1618
        %v1620 = vrcp.pop %v1602
        %v1621 = vmul.f32 %v1581, %v1620
        %v1622 = vrcp.pop %v1605
        %v1623 = vmul.f32 %v1583, %v1622
        %v1624 = vrcp.pop %v1608
        %v1625 = vmul.f32 %v1585, %v1624
        %v1626 = vrcp.pop %v1611
        %v1627 = vmul.f32 %v1587, %v1626
        %1629 = vset.pattern.permute.xlu0 0
        %1630 = vperm.xlu0 %1629, %v1613
        %v1631 = vpop.permute.xlu0 %1630
        %1634 = vset.pattern.permute.xlu0 0
        %1635 = vperm.xlu0 %1634, %v1615
        %v1636 = vpop.permute.xlu0 %1635
        %1639 = vset.pattern.permute.xlu0 0
        %1640 = vperm.xlu0 %1639, %v1617
        %v1641 = vpop.permute.xlu0 %1640
        %1644 = vset.pattern.permute.xlu0 0
        %1645 = vperm.xlu0 %1644, %v1619
        %v1646 = vpop.permute.xlu0 %1645
        %1649 = vset.pattern.permute.xlu0 0
        %1650 = vperm.xlu0 %1649, %v1621
        %v1651 = vpop.permute.xlu0 %1650
        %1654 = vset.pattern.permute.xlu0 0
        %1655 = vperm.xlu0 %1654, %v1623
        %v1656 = vpop.permute.xlu0 %1655
        %1659 = vset.pattern.permute.xlu0 0
        %1660 = vperm.xlu0 %1659, %v1625
        %v1661 = vpop.permute.xlu0 %1660
        %1664 = vset.pattern.permute.xlu0 0
        %1665 = vperm.xlu0 %1664, %v1627
        %v1666 = vpop.permute.xlu0 %1665
        %v1668 = vmul.f32 %v1631, %v1453
        %v1669 = vmul.f32 %v1636, %v1457
        %v1670 = vmul.f32 %v1641, %v1463
        %v1671 = vmul.f32 %v1646, %v1467
        %v1672 = vmul.f32 %v1651, %v1473
        %v1673 = vmul.f32 %v1656, %v1477
        %v1674 = vmul.f32 %v1661, %v1483
        %v1675 = vmul.f32 %v1666, %v1487
        %1676 = vset.pattern.permute.xlu0 1
        %1677 = vperm.xlu0 %1676, %v1613
        %v1678 = vpop.permute.xlu0 %1677
        %1680 = vset.pattern.permute.xlu0 1
        %1681 = vperm.xlu0 %1680, %v1615
        %v1682 = vpop.permute.xlu0 %1681
        %1684 = vset.pattern.permute.xlu0 1
        %1685 = vperm.xlu0 %1684, %v1617
        %v1686 = vpop.permute.xlu0 %1685
        %1688 = vset.pattern.permute.xlu0 1
        %1689 = vperm.xlu0 %1688, %v1619
        %v1690 = vpop.permute.xlu0 %1689
        %1692 = vset.pattern.permute.xlu0 1
        %1693 = vperm.xlu0 %1692, %v1621
        %v1694 = vpop.permute.xlu0 %1693
        %1696 = vset.pattern.permute.xlu0 1
        %1697 = vperm.xlu0 %1696, %v1623
        %v1698 = vpop.permute.xlu0 %1697
        %1700 = vset.pattern.permute.xlu0 1
        %1701 = vperm.xlu0 %1700, %v1625
        %v1702 = vpop.permute.xlu0 %1701
        %1704 = vset.pattern.permute.xlu0 1
        %1705 = vperm.xlu0 %1704, %v1627
        %v1706 = vpop.permute.xlu0 %1705
        %v1708 = vmul.f32 %v1678, %v1453
        %v1709 = vmul.f32 %v1682, %v1457
        %v1710 = vmul.f32 %v1686, %v1463
        %v1711 = vmul.f32 %v1690, %v1467
        %v1712 = vmul.f32 %v1694, %v1473
        %v1713 = vmul.f32 %v1698, %v1477
        %v1714 = vmul.f32 %v1702, %v1483
        %v1715 = vmul.f32 %v1706, %v1487
        %1724 = vrot.lane.b32.xlu0 %v1708, 112
        %v1725 = vpop.permute.xlu0 %1724
        %1726 = vrot.lane.b32.xlu0 %v1709, 112
        %v1727 = vpop.permute.xlu0 %1726
        %1728 = vrot.lane.b32.xlu0 %v1710, 112
        %v1729 = vpop.permute.xlu0 %1728
        %1730 = vrot.lane.b32.xlu0 %v1711, 112
        %v1731 = vpop.permute.xlu0 %1730
        %1732 = vrot.lane.b32.xlu0 %v1712, 112
        %v1733 = vpop.permute.xlu0 %1732
        %1734 = vrot.lane.b32.xlu0 %v1713, 112
        %v1735 = vpop.permute.xlu0 %1734
        %1736 = vrot.lane.b32.xlu0 %v1714, 112
        %v1737 = vpop.permute.xlu0 %1736
        %1738 = vrot.lane.b32.xlu0 %v1715, 112
        %v1739 = vpop.permute.xlu0 %1738
        %v1748 = vadd.f32 %v1668, %v1725
        %v1749 = vadd.f32 %v1669, %v1727
        %v1750 = vadd.f32 %v1670, %v1729
        %v1751 = vadd.f32 %v1671, %v1731
        %v1752 = vadd.f32 %v1672, %v1733
        %v1753 = vadd.f32 %v1673, %v1735
        %v1754 = vadd.f32 %v1674, %v1737
        %v1755 = vadd.f32 %v1675, %v1739
        %1756 = vset.pattern.permute.xlu0 2
        %1757 = vperm.xlu0 %1756, %v1613
        %v1758 = vpop.permute.xlu0 %1757
        %1760 = vset.pattern.permute.xlu0 2
        %1761 = vperm.xlu0 %1760, %v1615
        %v1762 = vpop.permute.xlu0 %1761
        %1764 = vset.pattern.permute.xlu0 2
        %1765 = vperm.xlu0 %1764, %v1617
        %v1766 = vpop.permute.xlu0 %1765
        %1768 = vset.pattern.permute.xlu0 2
        %1769 = vperm.xlu0 %1768, %v1619
        %v1770 = vpop.permute.xlu0 %1769
        %1772 = vset.pattern.permute.xlu0 2
        %1773 = vperm.xlu0 %1772, %v1621
        %v1774 = vpop.permute.xlu0 %1773
        %1776 = vset.pattern.permute.xlu0 2
        %1777 = vperm.xlu0 %1776, %v1623
        %v1778 = vpop.permute.xlu0 %1777
        %1780 = vset.pattern.permute.xlu0 2
        %1781 = vperm.xlu0 %1780, %v1625
        %v1782 = vpop.permute.xlu0 %1781
        %1784 = vset.pattern.permute.xlu0 2
        %1785 = vperm.xlu0 %1784, %v1627
        %v1786 = vpop.permute.xlu0 %1785
        %v1788 = vmul.f32 %v1758, %v1453
        %v1789 = vmul.f32 %v1762, %v1457
        %v1790 = vmul.f32 %v1766, %v1463
        %v1791 = vmul.f32 %v1770, %v1467
        %v1792 = vmul.f32 %v1774, %v1473
        %v1793 = vmul.f32 %v1778, %v1477
        %v1794 = vmul.f32 %v1782, %v1483
        %v1795 = vmul.f32 %v1786, %v1487
        %1804 = vrot.lane.b32.xlu0 %v1788, 96
        %v1805 = vpop.permute.xlu0 %1804
        %1806 = vrot.lane.b32.xlu0 %v1789, 96
        %v1807 = vpop.permute.xlu0 %1806
        %1808 = vrot.lane.b32.xlu0 %v1790, 96
        %v1809 = vpop.permute.xlu0 %1808
        %1810 = vrot.lane.b32.xlu0 %v1791, 96
        %v1811 = vpop.permute.xlu0 %1810
        %1812 = vrot.lane.b32.xlu0 %v1792, 96
        %v1813 = vpop.permute.xlu0 %1812
        %1814 = vrot.lane.b32.xlu0 %v1793, 96
        %v1815 = vpop.permute.xlu0 %1814
        %1816 = vrot.lane.b32.xlu0 %v1794, 96
        %v1817 = vpop.permute.xlu0 %1816
        %1818 = vrot.lane.b32.xlu0 %v1795, 96
        %v1819 = vpop.permute.xlu0 %1818
        %v1828 = vadd.f32 %v1748, %v1805
        %v1829 = vadd.f32 %v1749, %v1807
        %v1830 = vadd.f32 %v1750, %v1809
        %v1831 = vadd.f32 %v1751, %v1811
        %v1832 = vadd.f32 %v1752, %v1813
        %v1833 = vadd.f32 %v1753, %v1815
        %v1834 = vadd.f32 %v1754, %v1817
        %v1835 = vadd.f32 %v1755, %v1819
        %1836 = vset.pattern.permute.xlu0 3
        %1837 = vperm.xlu0 %1836, %v1613
        %v1838 = vpop.permute.xlu0 %1837
        %1840 = vset.pattern.permute.xlu0 3
        %1841 = vperm.xlu0 %1840, %v1615
        %v1842 = vpop.permute.xlu0 %1841
        %1844 = vset.pattern.permute.xlu0 3
        %1845 = vperm.xlu0 %1844, %v1617
        %v1846 = vpop.permute.xlu0 %1845
        %1848 = vset.pattern.permute.xlu0 3
        %1849 = vperm.xlu0 %1848, %v1619
        %v1850 = vpop.permute.xlu0 %1849
        %1852 = vset.pattern.permute.xlu0 3
        %1853 = vperm.xlu0 %1852, %v1621
        %v1854 = vpop.permute.xlu0 %1853
        %1856 = vset.pattern.permute.xlu0 3
        %1857 = vperm.xlu0 %1856, %v1623
        %v1858 = vpop.permute.xlu0 %1857
        %1860 = vset.pattern.permute.xlu0 3
        %1861 = vperm.xlu0 %1860, %v1625
        %v1862 = vpop.permute.xlu0 %1861
        %1864 = vset.pattern.permute.xlu0 3
        %1865 = vperm.xlu0 %1864, %v1627
        %v1866 = vpop.permute.xlu0 %1865
        %v1868 = vmul.f32 %v1838, %v1453
        %v1869 = vmul.f32 %v1842, %v1457
        %v1870 = vmul.f32 %v1846, %v1463
        %v1871 = vmul.f32 %v1850, %v1467
        %v1872 = vmul.f32 %v1854, %v1473
        %v1873 = vmul.f32 %v1858, %v1477
        %v1874 = vmul.f32 %v1862, %v1483
        %v1875 = vmul.f32 %v1866, %v1487
        %1884 = vrot.lane.b32.xlu0 %v1868, 80
        %v1885 = vpop.permute.xlu0 %1884
        %1886 = vrot.lane.b32.xlu0 %v1869, 80
        %v1887 = vpop.permute.xlu0 %1886
        %1888 = vrot.lane.b32.xlu0 %v1870, 80
        %v1889 = vpop.permute.xlu0 %1888
        %1890 = vrot.lane.b32.xlu0 %v1871, 80
        %v1891 = vpop.permute.xlu0 %1890
        %1892 = vrot.lane.b32.xlu0 %v1872, 80
        %v1893 = vpop.permute.xlu0 %1892
        %1894 = vrot.lane.b32.xlu0 %v1873, 80
        %v1895 = vpop.permute.xlu0 %1894
        %1896 = vrot.lane.b32.xlu0 %v1874, 80
        %v1897 = vpop.permute.xlu0 %1896
        %1898 = vrot.lane.b32.xlu0 %v1875, 80
        %v1899 = vpop.permute.xlu0 %1898
        %v1908 = vadd.f32 %v1828, %v1885
        %v1909 = vadd.f32 %v1829, %v1887
        %v1910 = vadd.f32 %v1830, %v1889
        %v1911 = vadd.f32 %v1831, %v1891
        %v1912 = vadd.f32 %v1832, %v1893
        %v1913 = vadd.f32 %v1833, %v1895
        %v1914 = vadd.f32 %v1834, %v1897
        %v1915 = vadd.f32 %v1835, %v1899
        %1916 = vset.pattern.permute.xlu0 4
        %1917 = vperm.xlu0 %1916, %v1613
        %v1918 = vpop.permute.xlu0 %1917
        %1920 = vset.pattern.permute.xlu0 4
        %1921 = vperm.xlu0 %1920, %v1615
        %v1922 = vpop.permute.xlu0 %1921
        %1924 = vset.pattern.permute.xlu0 4
        %1925 = vperm.xlu0 %1924, %v1617
        %v1926 = vpop.permute.xlu0 %1925
        %1928 = vset.pattern.permute.xlu0 4
        %1929 = vperm.xlu0 %1928, %v1619
        %v1930 = vpop.permute.xlu0 %1929
        %1932 = vset.pattern.permute.xlu0 4
        %1933 = vperm.xlu0 %1932, %v1621
        %v1934 = vpop.permute.xlu0 %1933
        %1936 = vset.pattern.permute.xlu0 4
        %1937 = vperm.xlu0 %1936, %v1623
        %v1938 = vpop.permute.xlu0 %1937
        %1940 = vset.pattern.permute.xlu0 4
        %1941 = vperm.xlu0 %1940, %v1625
        %v1942 = vpop.permute.xlu0 %1941
        %1944 = vset.pattern.permute.xlu0 4
        %1945 = vperm.xlu0 %1944, %v1627
        %v1946 = vpop.permute.xlu0 %1945
        %v1948 = vmul.f32 %v1918, %v1453
        %v1949 = vmul.f32 %v1922, %v1457
        %v1950 = vmul.f32 %v1926, %v1463
        %v1951 = vmul.f32 %v1930, %v1467
        %v1952 = vmul.f32 %v1934, %v1473
        %v1953 = vmul.f32 %v1938, %v1477
        %v1954 = vmul.f32 %v1942, %v1483
        %v1955 = vmul.f32 %v1946, %v1487
        %1964 = vrot.lane.b32.xlu0 %v1948, 64
        %v1965 = vpop.permute.xlu0 %1964
        %1966 = vrot.lane.b32.xlu0 %v1949, 64
        %v1967 = vpop.permute.xlu0 %1966
        %1968 = vrot.lane.b32.xlu0 %v1950, 64
        %v1969 = vpop.permute.xlu0 %1968
        %1970 = vrot.lane.b32.xlu0 %v1951, 64
        %v1971 = vpop.permute.xlu0 %1970
        %1972 = vrot.lane.b32.xlu0 %v1952, 64
        %v1973 = vpop.permute.xlu0 %1972
        %1974 = vrot.lane.b32.xlu0 %v1953, 64
        %v1975 = vpop.permute.xlu0 %1974
        %1976 = vrot.lane.b32.xlu0 %v1954, 64
        %v1977 = vpop.permute.xlu0 %1976
        %1978 = vrot.lane.b32.xlu0 %v1955, 64
        %v1979 = vpop.permute.xlu0 %1978
        %v1988 = vadd.f32 %v1908, %v1965
        %v1989 = vadd.f32 %v1909, %v1967
        %v1990 = vadd.f32 %v1910, %v1969
        %v1991 = vadd.f32 %v1911, %v1971
        %v1992 = vadd.f32 %v1912, %v1973
        %v1993 = vadd.f32 %v1913, %v1975
        %v1994 = vadd.f32 %v1914, %v1977
        %v1995 = vadd.f32 %v1915, %v1979
        %1996 = vset.pattern.permute.xlu0 5
        %1997 = vperm.xlu0 %1996, %v1613
        %v1998 = vpop.permute.xlu0 %1997
        %2000 = vset.pattern.permute.xlu0 5
        %2001 = vperm.xlu0 %2000, %v1615
        %v2002 = vpop.permute.xlu0 %2001
        %2004 = vset.pattern.permute.xlu0 5
        %2005 = vperm.xlu0 %2004, %v1617
        %v2006 = vpop.permute.xlu0 %2005
        %2008 = vset.pattern.permute.xlu0 5
        %2009 = vperm.xlu0 %2008, %v1619
        %v2010 = vpop.permute.xlu0 %2009
        %2012 = vset.pattern.permute.xlu0 5
        %2013 = vperm.xlu0 %2012, %v1621
        %v2014 = vpop.permute.xlu0 %2013
        %2016 = vset.pattern.permute.xlu0 5
        %2017 = vperm.xlu0 %2016, %v1623
        %v2018 = vpop.permute.xlu0 %2017
        %2020 = vset.pattern.permute.xlu0 5
        %2021 = vperm.xlu0 %2020, %v1625
        %v2022 = vpop.permute.xlu0 %2021
        %2024 = vset.pattern.permute.xlu0 5
        %2025 = vperm.xlu0 %2024, %v1627
        %v2026 = vpop.permute.xlu0 %2025
        %v2028 = vmul.f32 %v1998, %v1453
        %v2029 = vmul.f32 %v2002, %v1457
        %v2030 = vmul.f32 %v2006, %v1463
        %v2031 = vmul.f32 %v2010, %v1467
        %v2032 = vmul.f32 %v2014, %v1473
        %v2033 = vmul.f32 %v2018, %v1477
        %v2034 = vmul.f32 %v2022, %v1483
        %v2035 = vmul.f32 %v2026, %v1487
        %2044 = vrot.lane.b32.xlu0 %v2028, 48
        %v2045 = vpop.permute.xlu0 %2044
        %2046 = vrot.lane.b32.xlu0 %v2029, 48
        %v2047 = vpop.permute.xlu0 %2046
        %2048 = vrot.lane.b32.xlu0 %v2030, 48
        %v2049 = vpop.permute.xlu0 %2048
        %2050 = vrot.lane.b32.xlu0 %v2031, 48
        %v2051 = vpop.permute.xlu0 %2050
        %2052 = vrot.lane.b32.xlu0 %v2032, 48
        %v2053 = vpop.permute.xlu0 %2052
        %2054 = vrot.lane.b32.xlu0 %v2033, 48
        %v2055 = vpop.permute.xlu0 %2054
        %2056 = vrot.lane.b32.xlu0 %v2034, 48
        %v2057 = vpop.permute.xlu0 %2056
        %2058 = vrot.lane.b32.xlu0 %v2035, 48
        %v2059 = vpop.permute.xlu0 %2058
        %v2068 = vadd.f32 %v1988, %v2045
        %v2069 = vadd.f32 %v1989, %v2047
        %v2070 = vadd.f32 %v1990, %v2049
        %v2071 = vadd.f32 %v1991, %v2051
        %v2072 = vadd.f32 %v1992, %v2053
        %v2073 = vadd.f32 %v1993, %v2055
        %v2074 = vadd.f32 %v1994, %v2057
        %v2075 = vadd.f32 %v1995, %v2059
        %2076 = vset.pattern.permute.xlu0 6
        %2077 = vperm.xlu0 %2076, %v1613
        %v2078 = vpop.permute.xlu0 %2077
        %2080 = vset.pattern.permute.xlu0 6
        %2081 = vperm.xlu0 %2080, %v1615
        %v2082 = vpop.permute.xlu0 %2081
        %2084 = vset.pattern.permute.xlu0 6
        %2085 = vperm.xlu0 %2084, %v1617
        %v2086 = vpop.permute.xlu0 %2085
        %2088 = vset.pattern.permute.xlu0 6
        %2089 = vperm.xlu0 %2088, %v1619
        %v2090 = vpop.permute.xlu0 %2089
        %2092 = vset.pattern.permute.xlu0 6
        %2093 = vperm.xlu0 %2092, %v1621
        %v2094 = vpop.permute.xlu0 %2093
        %2096 = vset.pattern.permute.xlu0 6
        %2097 = vperm.xlu0 %2096, %v1623
        %v2098 = vpop.permute.xlu0 %2097
        %2100 = vset.pattern.permute.xlu0 6
        %2101 = vperm.xlu0 %2100, %v1625
        %v2102 = vpop.permute.xlu0 %2101
        %2104 = vset.pattern.permute.xlu0 6
        %2105 = vperm.xlu0 %2104, %v1627
        %v2106 = vpop.permute.xlu0 %2105
        %v2108 = vmul.f32 %v2078, %v1453
        %v2109 = vmul.f32 %v2082, %v1457
        %v2110 = vmul.f32 %v2086, %v1463
        %v2111 = vmul.f32 %v2090, %v1467
        %v2112 = vmul.f32 %v2094, %v1473
        %v2113 = vmul.f32 %v2098, %v1477
        %v2114 = vmul.f32 %v2102, %v1483
        %v2115 = vmul.f32 %v2106, %v1487
        %2124 = vrot.lane.b32.xlu0 %v2108, 32
        %v2125 = vpop.permute.xlu0 %2124
        %2126 = vrot.lane.b32.xlu0 %v2109, 32
        %v2127 = vpop.permute.xlu0 %2126
        %2128 = vrot.lane.b32.xlu0 %v2110, 32
        %v2129 = vpop.permute.xlu0 %2128
        %2130 = vrot.lane.b32.xlu0 %v2111, 32
        %v2131 = vpop.permute.xlu0 %2130
        %2132 = vrot.lane.b32.xlu0 %v2112, 32
        %v2133 = vpop.permute.xlu0 %2132
        %2134 = vrot.lane.b32.xlu0 %v2113, 32
        %v2135 = vpop.permute.xlu0 %2134
        %2136 = vrot.lane.b32.xlu0 %v2114, 32
        %v2137 = vpop.permute.xlu0 %2136
        %2138 = vrot.lane.b32.xlu0 %v2115, 32
        %v2139 = vpop.permute.xlu0 %2138
        %v2148 = vadd.f32 %v2068, %v2125
        %v2149 = vadd.f32 %v2069, %v2127
        %v2150 = vadd.f32 %v2070, %v2129
        %v2151 = vadd.f32 %v2071, %v2131
        %v2152 = vadd.f32 %v2072, %v2133
        %v2153 = vadd.f32 %v2073, %v2135
        %v2154 = vadd.f32 %v2074, %v2137
        %v2155 = vadd.f32 %v2075, %v2139
        %2156 = vset.pattern.permute.xlu0 7
        %2157 = vperm.xlu0 %2156, %v1613
        %v2158 = vpop.permute.xlu0 %2157
        %2160 = vset.pattern.permute.xlu0 7
        %2161 = vperm.xlu0 %2160, %v1615
        %v2162 = vpop.permute.xlu0 %2161
        %2164 = vset.pattern.permute.xlu0 7
        %2165 = vperm.xlu0 %2164, %v1617
        %v2166 = vpop.permute.xlu0 %2165
        %2168 = vset.pattern.permute.xlu0 7
        %2169 = vperm.xlu0 %2168, %v1619
        %v2170 = vpop.permute.xlu0 %2169
        %2172 = vset.pattern.permute.xlu0 7
        %2173 = vperm.xlu0 %2172, %v1621
        %v2174 = vpop.permute.xlu0 %2173
        %2176 = vset.pattern.permute.xlu0 7
        %2177 = vperm.xlu0 %2176, %v1623
        %v2178 = vpop.permute.xlu0 %2177
        %2180 = vset.pattern.permute.xlu0 7
        %2181 = vperm.xlu0 %2180, %v1625
        %v2182 = vpop.permute.xlu0 %2181
        %2184 = vset.pattern.permute.xlu0 7
        %2185 = vperm.xlu0 %2184, %v1627
        %v2186 = vpop.permute.xlu0 %2185
        %v2188 = vmul.f32 %v2158, %v1453
        %v2189 = vmul.f32 %v2162, %v1457
        %v2190 = vmul.f32 %v2166, %v1463
        %v2191 = vmul.f32 %v2170, %v1467
        %v2192 = vmul.f32 %v2174, %v1473
        %v2193 = vmul.f32 %v2178, %v1477
        %v2194 = vmul.f32 %v2182, %v1483
        %v2195 = vmul.f32 %v2186, %v1487
        %2204 = vrot.lane.b32.xlu0 %v2188, 16
        %v2205 = vpop.permute.xlu0 %2204
        %2206 = vrot.lane.b32.xlu0 %v2189, 16
        %v2207 = vpop.permute.xlu0 %2206
        %2208 = vrot.lane.b32.xlu0 %v2190, 16
        %v2209 = vpop.permute.xlu0 %2208
        %2210 = vrot.lane.b32.xlu0 %v2191, 16
        %v2211 = vpop.permute.xlu0 %2210
        %2212 = vrot.lane.b32.xlu0 %v2192, 16
        %v2213 = vpop.permute.xlu0 %2212
        %2214 = vrot.lane.b32.xlu0 %v2193, 16
        %v2215 = vpop.permute.xlu0 %2214
        %2216 = vrot.lane.b32.xlu0 %v2194, 16
        %v2217 = vpop.permute.xlu0 %2216
        %2218 = vrot.lane.b32.xlu0 %v2195, 16
        %v2219 = vpop.permute.xlu0 %2218
        %v2228 = vadd.f32 %v2148, %v2205
        %v2229 = vadd.f32 %v2149, %v2207
        %v2230 = vadd.f32 %v2150, %v2209
        %v2231 = vadd.f32 %v2151, %v2211
        %v2232 = vadd.f32 %v2152, %v2213
        %v2233 = vadd.f32 %v2153, %v2215
        %v2234 = vadd.f32 %v2154, %v2217
        %v2235 = vadd.f32 %v2155, %v2219
        %vm2236 = vcmask 130048
        %2237 = vst.msk [vmem:[%s286] sm:$0xff] %vm2236, %v2228
        %2238 = vst.msk [vmem:[%s286 + $0x8] sm:$0xff] %vm2236, %v2229
        %2239 = vst.msk [vmem:[%s286 + $0x10] sm:$0xff] %vm2236, %v2230
        %2240 = vst.msk [vmem:[%s286 + $0x18] sm:$0xff] %vm2236, %v2231
        %2241 = vst.msk [vmem:[%s286 + $0x20] sm:$0xff] %vm2236, %v2232
        %2242 = vst.msk [vmem:[%s286 + $0x28] sm:$0xff] %vm2236, %v2233
        %2243 = vst.msk [vmem:[%s286 + $0x30] sm:$0xff] %vm2236, %v2234
        %2244 = vst.msk [vmem:[%s286 + $0x38] sm:$0xff] %vm2236, %v2235
        %s2245 = sand.u32 %s161, 1
        %s2246 = sand.u32 %s161, 1
        %s2247 = smul.addr %s2246, 64
        %s2248 = scalar_lea.vmem [#allocation2], %s2247
        // Predicated region
        $region45: #{simple_multi_view_head.1} parent=43 // pred_check
          %p2249 = pneg %p171
        $region46: #{simple_multi_view_head.1} parent=43 // pred_check_branch
          %2251 = sbr.rel (%p2249) target = $region48
        $region47: #{simple_multi_view_head.1} parent=43 // pred_region
          %s2252 = smul.u32 8, %s17
          %s2253 = ssub.s32 12, %s2252
          %p2254 = scmp.lt.s32.totalorder %s2253, 8
          %s2255 = scalar_select %p2254, %s2253, 8
          %s2256 = smul.u32 128, %s2255
          %p2257 = scmp.ne.s32.totalorder 0, %s2256
          %s2258 = smul.addr %s2252, 8
          %s2259 = scalar_lea.vmem %s6, %s2258
          // Predicated region
          $region49: #{simple_multi_view_head.1} parent=47 // pred_check
            %p2260 = pneg %p2257
          $region50: #{simple_multi_view_head.1} parent=47 // pred_check_branch
            %2262 = sbr.rel (%p2260) target = $region52
          $region51: #{simple_multi_view_head.1} parent=47 // pred_region
            // Predicated region
            $region53: #{simple_multi_view_head.1} parent=51 // pred_check
              _
            $region54: #{simple_multi_view_head.1} parent=51 // pred_check_branch
              %2264 = sbr.rel (0) target = $region56
            $region55: #{simple_multi_view_head.1} parent=51 // pred_region
              // Predicated region
              $region75: #{simple_multi_view_head.1} parent=55 // pred_check
                _
              $region76: #{simple_multi_view_head.1} parent=55 // pred_check_branch
                %2327 = sbr.rel (0) target = $region78
              $region77: #{simple_multi_view_head.1} parent=55 // pred_region
                %s2328 = sshrl.u32 %s2255, 3
                // While loop
                $region79: #{simple_multi_view_head.1} parent=77 // loop_pre_header
                  _
                $region80: #{simple_multi_view_head.1} parent=77 // loop_header
                  %s2330 = sphi 0, %s2332
                  %p2331 = scmp.ge.s32.totalorder %s2330, %s2328
                  %s2335 = sphi 0, %s2356
                  %s2336 = sphi %s2248, %s2359
                  %s2337 = sphi %s2259, %s2360
                $region81: #{simple_multi_view_head.1} parent=77 // loop_header_branch
                  %2334 = sbr.rel (%p2331) target = $region85
                $region82: #{simple_multi_view_head.1} parent=77 // loop_body
                  %v2338 = vld [vmem:[%s2336] sm:$0xff]
                  %2339 = vst [vmem:[%s2337] sm:$0xff] %v2338
                  %v2340 = vld [vmem:[%s2336 + $0x8] sm:$0xff]
                  %2341 = vst [vmem:[%s2337 + $0x8] sm:$0xff] %v2340
                  %v2342 = vld [vmem:[%s2336 + $0x10] sm:$0xff]
                  %2343 = vst [vmem:[%s2337 + $0x10] sm:$0xff] %v2342
                  %v2344 = vld [vmem:[%s2336 + $0x18] sm:$0xff]
                  %2345 = vst [vmem:[%s2337 + $0x18] sm:$0xff] %v2344
                  %v2346 = vld [vmem:[%s2336 + $0x20] sm:$0xff]
                  %2347 = vst [vmem:[%s2337 + $0x20] sm:$0xff] %v2346
                  %v2348 = vld [vmem:[%s2336 + $0x28] sm:$0xff]
                  %2349 = vst [vmem:[%s2337 + $0x28] sm:$0xff] %v2348
                  %v2350 = vld [vmem:[%s2336 + $0x30] sm:$0xff]
                  %2351 = vst [vmem:[%s2337 + $0x30] sm:$0xff] %v2350
                  %v2352 = vld [vmem:[%s2336 + $0x38] sm:$0xff]
                  %2353 = vst [vmem:[%s2337 + $0x38] sm:$0xff] %v2352
                  %s2354 = sadd.s32 1, %s2335
                  %p2355 = scmp.ge.s32.totalorder %s2354, %s2328
                  %s2356 = scalar_select %p2355, 0, %s2354
                  %s2357 = smul.u32 %s2356, 64
                  %s2358 = smul.u32 %s2356, 64
                  %s2359 = scalar_lea.vmem %s2248, %s2357 [#allocation2]
                  %s2360 = scalar_lea.vmem %s2259, %s2358
                $region83: #{simple_multi_view_head.1} parent=77 // loop_footer
                  %s2332 = sadd.s32 %s2330, 1
                $region84: #{simple_multi_view_head.1} parent=77 // loop_footer_branch
                  %2329 = sbr.rel target = $region80
                $region85: #{simple_multi_view_head.1} parent=77 // loop_exit
                  _
                %s2361 = sshrl.u32 %s2255, 3
                %s2362 = sand.u32 %s2255, 7
                %s2363 = smul.u32 %s2361, 8
                %s2364 = smul.u32 8, %s2363
                %s2365 = scalar_lea.vmem %s2248, %s2364 [#allocation2]
                %s2366 = smul.u32 8, %s2363
                %s2367 = scalar_lea.vmem %s2259, %s2366
                // While loop
                $region86: #{simple_multi_view_head.1} parent=77 // loop_pre_header
                  _
                $region87: #{simple_multi_view_head.1} parent=77 // loop_header
                  %s2369 = sphi 0, %s2371
                  %p2370 = scmp.ge.s32.totalorder %s2369, %s2362
                  %s2374 = sphi 0, %s2381
                  %s2375 = sphi %s2365, %s2384
                  %s2376 = sphi %s2367, %s2385
                $region88: #{simple_multi_view_head.1} parent=77 // loop_header_branch
                  %2373 = sbr.rel (%p2370) target = $region92
                $region89: #{simple_multi_view_head.1} parent=77 // loop_body
                  %v2377 = vld [vmem:[%s2375] sm:$0xff]
                  %2378 = vst [vmem:[%s2376] sm:$0xff] %v2377
                  %s2379 = sadd.s32 1, %s2374
                  %p2380 = scmp.ge.s32.totalorder %s2379, %s2362
                  %s2381 = scalar_select %p2380, 0, %s2379
                  %s2382 = smul.u32 %s2381, 8
                  %s2383 = smul.u32 %s2381, 8
                  %s2384 = scalar_lea.vmem %s2365, %s2382 [#allocation2]
                  %s2385 = scalar_lea.vmem %s2367, %s2383
                $region90: #{simple_multi_view_head.1} parent=77 // loop_footer
                  %s2371 = sadd.s32 %s2369, 1
                $region91: #{simple_multi_view_head.1} parent=77 // loop_footer_branch
                  %2368 = sbr.rel target = $region87
                $region92: #{simple_multi_view_head.1} parent=77 // loop_exit
                  _
              $region78: #{simple_multi_view_head.1} parent=55 // pred_fallthru
                _
              // Predicated region
              $region93: #{simple_multi_view_head.1} parent=55 // pred_check
                _
              $region94: #{simple_multi_view_head.1} parent=55 // pred_check_branch
                %2387 = sbr.rel target = $region96
              $region95: #{simple_multi_view_head.1} parent=55 // pred_region
                _
              $region96: #{simple_multi_view_head.1} parent=55 // pred_fallthru
                _
            $region56: #{simple_multi_view_head.1} parent=51 // pred_fallthru
              _
            // Predicated region
            $region57: #{simple_multi_view_head.1} parent=51 // pred_check
              _
            $region58: #{simple_multi_view_head.1} parent=51 // pred_check_branch
              %2266 = sbr.rel target = $region60
            $region59: #{simple_multi_view_head.1} parent=51 // pred_region
              %s2268 = sshrl.u32 %s2255, 3
              // While loop
              $region61: #{simple_multi_view_head.1} parent=59 // loop_pre_header
                _
              $region62: #{simple_multi_view_head.1} parent=59 // loop_header
                %s2270 = sphi 0, %s2272
                %p2271 = scmp.ge.s32.totalorder %s2270, %s2268
                %s2275 = sphi 0, %s2296
                %s2276 = sphi %s2248, %s2299
                %s2277 = sphi %s2259, %s2300
              $region63: #{simple_multi_view_head.1} parent=59 // loop_header_branch
                %2274 = sbr.rel (%p2271) target = $region67
              $region64: #{simple_multi_view_head.1} parent=59 // loop_body
                %v2278 = vld [vmem:[%s2276] sm:$0xff]
                %2279 = vst [vmem:[%s2277] sm:$0xff] %v2278
                %v2280 = vld [vmem:[%s2276 + $0x8] sm:$0xff]
                %2281 = vst [vmem:[%s2277 + $0x8] sm:$0xff] %v2280
                %v2282 = vld [vmem:[%s2276 + $0x10] sm:$0xff]
                %2283 = vst [vmem:[%s2277 + $0x10] sm:$0xff] %v2282
                %v2284 = vld [vmem:[%s2276 + $0x18] sm:$0xff]
                %2285 = vst [vmem:[%s2277 + $0x18] sm:$0xff] %v2284
                %v2286 = vld [vmem:[%s2276 + $0x20] sm:$0xff]
                %2287 = vst [vmem:[%s2277 + $0x20] sm:$0xff] %v2286
                %v2288 = vld [vmem:[%s2276 + $0x28] sm:$0xff]
                %2289 = vst [vmem:[%s2277 + $0x28] sm:$0xff] %v2288
                %v2290 = vld [vmem:[%s2276 + $0x30] sm:$0xff]
                %2291 = vst [vmem:[%s2277 + $0x30] sm:$0xff] %v2290
                %v2292 = vld [vmem:[%s2276 + $0x38] sm:$0xff]
                %2293 = vst [vmem:[%s2277 + $0x38] sm:$0xff] %v2292
                %s2294 = sadd.s32 1, %s2275
                %p2295 = scmp.ge.s32.totalorder %s2294, %s2268
                %s2296 = scalar_select %p2295, 0, %s2294
                %s2297 = smul.u32 %s2296, 64
                %s2298 = smul.u32 %s2296, 64
                %s2299 = scalar_lea.vmem %s2248, %s2297 [#allocation2]
                %s2300 = scalar_lea.vmem %s2259, %s2298
              $region65: #{simple_multi_view_head.1} parent=59 // loop_footer
                %s2272 = sadd.s32 %s2270, 1
              $region66: #{simple_multi_view_head.1} parent=59 // loop_footer_branch
                %2269 = sbr.rel target = $region62
              $region67: #{simple_multi_view_head.1} parent=59 // loop_exit
                _
              %s2301 = sshrl.u32 %s2255, 3
              %s2302 = sand.u32 %s2255, 7
              %s2303 = smul.u32 %s2301, 8
              %s2304 = smul.u32 8, %s2303
              %s2305 = scalar_lea.vmem %s2248, %s2304 [#allocation2]
              %s2306 = smul.u32 8, %s2303
              %s2307 = scalar_lea.vmem %s2259, %s2306
              // While loop
              $region68: #{simple_multi_view_head.1} parent=59 // loop_pre_header
                _
              $region69: #{simple_multi_view_head.1} parent=59 // loop_header
                %s2309 = sphi 0, %s2311
                %p2310 = scmp.ge.s32.totalorder %s2309, %s2302
                %s2314 = sphi 0, %s2321
                %s2315 = sphi %s2305, %s2324
                %s2316 = sphi %s2307, %s2325
              $region70: #{simple_multi_view_head.1} parent=59 // loop_header_branch
                %2313 = sbr.rel (%p2310) target = $region74
              $region71: #{simple_multi_view_head.1} parent=59 // loop_body
                %v2317 = vld [vmem:[%s2315] sm:$0xff]
                %2318 = vst [vmem:[%s2316] sm:$0xff] %v2317
                %s2319 = sadd.s32 1, %s2314
                %p2320 = scmp.ge.s32.totalorder %s2319, %s2302
                %s2321 = scalar_select %p2320, 0, %s2319
                %s2322 = smul.u32 %s2321, 8
                %s2323 = smul.u32 %s2321, 8
                %s2324 = scalar_lea.vmem %s2305, %s2322 [#allocation2]
                %s2325 = scalar_lea.vmem %s2307, %s2323
              $region72: #{simple_multi_view_head.1} parent=59 // loop_footer
                %s2311 = sadd.s32 %s2309, 1
              $region73: #{simple_multi_view_head.1} parent=59 // loop_footer_branch
                %2308 = sbr.rel target = $region69
              $region74: #{simple_multi_view_head.1} parent=59 // loop_exit
                _
            $region60: #{simple_multi_view_head.1} parent=51 // pred_fallthru
              _
          $region52: #{simple_multi_view_head.1} parent=47 // pred_fallthru
            _
          %2388 = vnop
        $region48: #{simple_multi_view_head.1} parent=43 // pred_fallthru
          _
      $region44: #{simple_multi_view_head.1} parent=5 // pred_fallthru
        _
      %p2389 = scmp.le.s32.totalorder 2, %s12
      // Predicated region
      $region97: #{simple_multi_view_head.1} parent=5 // pred_check
        %p2390 = pneg %p2389
      $region98: #{simple_multi_view_head.1} parent=5 // pred_check_branch
        %2392 = sbr.rel (%p2390) target = $region100
      $region99: #{simple_multi_view_head.1} parent=5 // pred_region
        %s2393 = ssub.s32 %s12, 2
        // Predicated region
        $region101: #{simple_multi_view_head.1} parent=99 // pred_check
          %p2394 = pneg %p177
        $region102: #{simple_multi_view_head.1} parent=99 // pred_check_branch
          %2396 = sbr.rel (%p2394) target = $region104
        $region103: #{simple_multi_view_head.1} parent=99 // pred_region
          %s2397 = sand.u32 %s162, 1
          %s2398 = sand.u32 %s162, 1
          %s2399 = smul.addr %s2398, 64
          %s2400 = scalar_lea.vmem [#allocation2], %s2399
        $region104: #{simple_multi_view_head.1} parent=99 // pred_fallthru
          _
      $region100: #{simple_multi_view_head.1} parent=5 // pred_fallthru
        _
    $region6: #{simple_multi_view_head.1} parent=1 // loop_footer
      %s16 = sadd.s32 1, %s12
    $region7: #{simple_multi_view_head.1} parent=1 // loop_footer_branch
      %11 = sbr.rel target = $region3
    $region8: #{simple_multi_view_head.1} parent=1 // loop_exit
      _

</llo_original>
